<compile_context>
chip_gen: v5e
topology: v5e:2x2
jax: 0.10.0
libtpu: 0.0.40
codegen_flags: <defaults>
</compile_context>

<pallas_src>
import jax
import jax.numpy as jnp
from jax.experimental import pallas as pl
from jax.experimental.pallas import tpu as pltpu


def _round_up(x, m):
    return (x + m - 1) // m * m


def _tpu_defaults():
    """Generation-aware VMEM budget and lane-tile cap.

    v7x has only 64 MiB physical VMEM -> 48 MiB scoped budget, 2048 tile cap.
    v5e/v6e have 128 MiB -> 64 MiB budget, 4096 tile cap.
    """
    try:
        kind = jax.devices()[0].device_kind.lower()
    except Exception:  # pragma: no cover - defensive; fall back to safe values
        kind = ""
    if "v7" in kind:
        return 48 * 1024 * 1024, 2048
    return 64 * 1024 * 1024, 4096


_VMEM_LIMIT, _M_TILE_CAP = _tpu_defaults()


def _pick_m_tile(m, cap=_M_TILE_CAP):
    """Tile for the lane (pixel/batch) axis: a multiple of 128, <= cap.

    Preference order: (1) at least 2 grid steps when the problem allows it
    (megacore sharding + DMA/compute pipelining), (2) low padding waste
    (5% buckets), (3) the largest tile (fewest grid steps / biggest DMAs).
    """
    m128 = _round_up(m, 128)
    cap = max(128, min(cap, m128))
    best_key, best_tm = None, 128
    for tm in range(128, cap + 1, 128):
        steps = -(-m128 // tm)
        m_pad = steps * tm
        waste_bucket = (m_pad - m) * 20 // m_pad          # 5% buckets
        two_steps = steps >= 2 or m128 == 128
        key = (not two_steps, waste_bucket, -tm)
        if best_key is None or key < best_key:
            best_key, best_tm = key, tm
    return best_tm


def _stream_spec(block_shape, index_map, steps):
    """BlockSpec for a streamed (per-grid-step) operand.

    Deepen buffering to 3 when the grid is long enough for the extra buffer
    to pay off; small grids keep the default double buffering.
    """
    if steps >= 3:
        return pl.BlockSpec(block_shape, index_map, pipeline_mode=pl.Buffered(3))
    return pl.BlockSpec(block_shape, index_map)


# ---------------------------------------------------------------------------
# Kernel 1: fused conv (im2col matmul) + bias + ReLU + 2x2 max-pool epilogue.
#   w: (4*OCp, 4*Kp) bf16 block-diagonal (one block per pool tap)
#   b: (OCp, 1) f32
#   p: (4*Kp, TM) bf16 tap-stacked patches
#   -> out: (OCp, TM) bf16.
# One MXU push covers all four 2x2 pool taps; the pool is a max over the four
# OCp-row groups; bias + ReLU are applied once, after the max (monotone).
# ---------------------------------------------------------------------------
def _conv_relu_pool_kernel(w_ref, b_ref, p_ref, o_ref):
    ocp = o_ref.shape[0]
    acc = jnp.dot(w_ref[...], p_ref[...], preferred_element_type=jnp.float32)
    pooled = jnp.maximum(
        jnp.maximum(acc[0:ocp], acc[ocp:2 * ocp]),
        jnp.maximum(acc[2 * ocp:3 * ocp], acc[3 * ocp:4 * ocp]),
    )
    o_ref[...] = jnp.maximum(pooled + b_ref[...], 0.0).astype(o_ref.dtype)


def conv_relu_pool(patches, w_bd, b_pad):
    """patches: (4, K, M) bf16 (tap, c*kh*kw, b*ph*pw).

    Returns (OCp, m_pad) bf16; caller slices the valid part.
    """
    _, K, M = patches.shape
    OCp4, Kp4 = w_bd.shape
    OCp, Kp = OCp4 // 4, Kp4 // 4
    tm = _pick_m_tile(M)
    m_pad = _round_up(M, tm)
    steps = m_pad // tm
    # Tap-stack to (4*Kp, m_pad) matching the block-diagonal weight layout.
    p = jnp.pad(patches, ((0, 0), (0, Kp - K), (0, m_pad - M))).reshape(Kp4, m_pad)

    flops = 2 * OCp4 * Kp4 * m_pad
    bytes_accessed = (Kp4 * m_pad + OCp4 * Kp4 + OCp * m_pad) * 2 + OCp * 4

    return pl.pallas_call(
        _conv_relu_pool_kernel,
        out_shape=jax.ShapeDtypeStruct((OCp, m_pad), jnp.bfloat16),
        grid_spec=pltpu.PrefetchScalarGridSpec(
            num_scalar_prefetch=0,
            grid=(steps,),
            in_specs=[
                pl.BlockSpec((OCp4, Kp4), lambda i: (0, 0)),   # weights, resident
                pl.BlockSpec((OCp, 1), lambda i: (0, 0)),      # bias, resident
                _stream_spec((Kp4, tm), lambda i: (0, i), steps),  # patch tile
            ],
            out_specs=pl.BlockSpec((OCp, tm), lambda i: (0, i)),
        ),
        compiler_params=pltpu.CompilerParams(
            dimension_semantics=("parallel",),
            vmem_limit_bytes=_VMEM_LIMIT,
        ),
        cost_estimate=pl.CostEstimate(
            flops=int(flops), transcendentals=0, bytes_accessed=int(bytes_accessed)),
    )(w_bd, b_pad, p)


# ---------------------------------------------------------------------------
# Kernel 2: fused fc1 + ReLU + fc2 + ReLU + fc3 (all weights VMEM-resident).
#   x: (400, TM) bf16 (batch in lanes) -> out: (16, TM) f32 (rows >=10 padding).
# ---------------------------------------------------------------------------
def _fc_stack_kernel(w1_ref, b1_ref, w2_ref, b2_ref, w3_ref, b3_ref, x_ref, o_ref):
    h = jnp.dot(w1_ref[...], x_ref[...], preferred_element_type=jnp.float32)
    h = jnp.maximum(h + b1_ref[...], 0.0)                         # (120, TM)
    h = jnp.dot(w2_ref[...], h.astype(jnp.bfloat16),
                preferred_element_type=jnp.float32)
    h = jnp.maximum(h + b2_ref[...], 0.0)                         # (88, TM)
    h = jnp.dot(w3_ref[...], h.astype(jnp.bfloat16),
                preferred_element_type=jnp.float32)
    o_ref[...] = h + b3_ref[...]                                  # (16, TM)


def fc_stack(feat, p):
    """feat: (400, B) bf16, batch last. Returns (16, m_pad) f32 logits (padded)."""
    K, M = feat.shape
    tm = _pick_m_tile(M)
    m_pad = _round_up(M, tm)
    steps = m_pad // tm
    x = jnp.pad(feat, ((0, 0), (0, m_pad - M))).astype(jnp.bfloat16)
    n1, k1 = p["fc1_w"].shape            # (120, 400)
    n2 = p["fc2_w"].shape[0]             # 88
    n3 = p["fc3_w"].shape[0]             # 16

    flops = 2 * m_pad * (n1 * k1 + n2 * n1 + n3 * n2)
    bytes_accessed = ((K * m_pad + n1 * k1 + n2 * n1 + n3 * n2) * 2
                      + (n1 + n2 + n3) * 4 + n3 * m_pad * 4)

    return pl.pallas_call(
        _fc_stack_kernel,
        out_shape=jax.ShapeDtypeStruct((n3, m_pad), jnp.float32),
        grid_spec=pltpu.PrefetchScalarGridSpec(
            num_scalar_prefetch=0,
            grid=(steps,),
            in_specs=[
                pl.BlockSpec((n1, k1), lambda i: (0, 0)),
                pl.BlockSpec((n1, 1), lambda i: (0, 0)),
                pl.BlockSpec((n2, n1), lambda i: (0, 0)),
                pl.BlockSpec((n2, 1), lambda i: (0, 0)),
                pl.BlockSpec((n3, n2), lambda i: (0, 0)),
                pl.BlockSpec((n3, 1), lambda i: (0, 0)),
                _stream_spec((K, tm), lambda i: (0, i), steps),
            ],
            out_specs=pl.BlockSpec((n3, tm), lambda i: (0, i)),
        ),
        compiler_params=pltpu.CompilerParams(
            dimension_semantics=("parallel",),
            vmem_limit_bytes=_VMEM_LIMIT,
        ),
        cost_estimate=pl.CostEstimate(
            flops=int(flops), transcendentals=0, bytes_accessed=int(bytes_accessed)),
    )(p["fc1_w"], p["fc1_b"], p["fc2_w"], p["fc2_b"], p["fc3_w"], p["fc3_b"], x)


# ---------------------------------------------------------------------------
# Glue (layout only, no arithmetic): pool-tap im2col patch extraction in bf16.
# Produces patches of shape (4, C*kh*kw, B*PH*PW):
#   axis 0 = which of the 2x2 conv outputs feeds a given pooled pixel,
#   axis 1 = (c, kh, kw) ordering (matches PyTorch weight.reshape(OC, -1)),
#   axis 2 = (b, ph, pw) pooled-pixel index (the lane axis of the matmul).
# bf16 is applied BEFORE the kh*kw expansion to halve the dominant HBM stream.
# TODO(synk): fold this gather into the conv kernel (manual DMA + VMEM tap
# construction) to remove the Kx HBM expansion entirely.
# ---------------------------------------------------------------------------
def pool_tap_patches(x_cbhw, kh, kw, pad):
    x_cbhw = x_cbhw.astype(jnp.bfloat16)
    if pad:
        x_cbhw = jnp.pad(x_cbhw, ((0, 0), (0, 0), (pad, pad), (pad, pad)))
    C, B, H, W = x_cbhw.shape
    OH, OW = H - kh + 1, W - kw + 1
    PH, PW = OH // 2, OW // 2
    taps = []
    for i in range(kh):
        for j in range(kw):
            taps.append(x_cbhw[:, :, i:i + OH, j:j + OW])   # (C, B, OH, OW)
    p = jnp.stack(taps, axis=1)                             # (C, kh*kw, B, OH, OW)
    p = p.reshape(C, kh * kw, B, PH, 2, PW, 2)              # split oh=(ph,dh), ow=(pw,dw)
    p = p.transpose(4, 6, 0, 1, 2, 3, 5)                    # (dh, dw, C, khkw, B, PH, PW)
    return p.reshape(4, C * kh * kw, B * PH * PW), PH, PW


# ---------------------------------------------------------------------------
# LeNet forward
# ---------------------------------------------------------------------------
def lenet_forward(x, prepared):
    B = x.shape[0]

    # conv1: Conv2d(1, 6, 5, 1, 2) + ReLU + MaxPool(2, 2)  -- one fused kernel
    p1, PH1, PW1 = pool_tap_patches(jnp.transpose(x, (1, 0, 2, 3)), 5, 5, pad=2)
    y1 = conv_relu_pool(p1, prepared["conv1_w"], prepared["conv1_b"])
    y1 = y1[:6, :B * PH1 * PW1].reshape(6, B, PH1, PW1)     # (6, B, 14, 14) CBHW bf16

    # conv2: Conv2d(6, 16, 5, 1, 0) + ReLU + MaxPool(2, 2) -- one fused kernel
    p2, PH2, PW2 = pool_tap_patches(y1, 5, 5, pad=0)
    y2 = conv_relu_pool(p2, prepared["conv2_w"], prepared["conv2_b"])
    y2 = y2[:16, :B * PH2 * PW2].reshape(16, B, PH2, PW2)   # (16, B, 5, 5) CBHW bf16

    # flatten in PyTorch NCHW order -> (C*H*W, B) = (400, B), batch in lanes
    feat = jnp.transpose(y2, (0, 2, 3, 1)).reshape(16 * PH2 * PW2, B)

    # fc1 + ReLU + fc2 + ReLU + fc3 -- one fused kernel
    logits = fc_stack(feat, prepared)                       # (16, m_pad) f32
    return jnp.transpose(logits[:10, :B], (1, 0))           # (B, 10) f32


# ---------------------------------------------------------------------------
# Parameters (PyTorch-shaped) and one-time Pallas prep
# ---------------------------------------------------------------------------
def init_params(key):
    ks = jax.random.split(key, 10)
    scale = 0.1
    f32 = jnp.float32
    return {
        # PyTorch parameter shapes (Conv2d: OIHW, Linear: (out, in))
        "conv1_w": scale * jax.random.normal(ks[0], (6, 1, 5, 5), f32),
        "conv1_b": scale * jax.random.normal(ks[1], (6,), f32),
        "conv2_w": scale * jax.random.normal(ks[2], (16, 6, 5, 5), f32),
        "conv2_b": scale * jax.random.normal(ks[3], (16,), f32),
        "fc1_w": scale * jax.random.normal(ks[4], (120, 400), f32),
        "fc1_b": scale * jax.random.normal(ks[5], (120,), f32),
        "fc2_w": scale * jax.random.normal(ks[6], (84, 120), f32),
        "fc2_b": scale * jax.random.normal(ks[7], (84,), f32),
        "fc3_w": scale * jax.random.normal(ks[8], (10, 84), f32),
        "fc3_b": scale * jax.random.normal(ks[9], (10,), f32),
    }


def prepare_params(params):
    """One-time weight prep: (OC, K) layout, zero-pad OC/K dims to sublane
    multiples of 8, build the 4-tap block-diagonal conv weights, cast MXU
    operands to bf16, keep biases in f32 as (OC, 1) columns."""
    bf16, f32 = jnp.bfloat16, jnp.float32

    def pad_to(a, shape):
        return jnp.pad(a, [(0, s - d) for s, d in zip(shape, a.shape)])

    def conv_block_diag(w, ocp, kp):
        # (OC, C, kh, kw) -> zero-padded (OCp, Kp) -> block-diagonal
        # (4*OCp, 4*Kp): one identical block per 2x2 pool tap, so all four
        # tap matmuls collapse into a single MXU push per tile.
        w2 = pad_to(w.reshape(w.shape[0], -1).astype(f32), (ocp, kp))
        return jnp.kron(jnp.eye(4, dtype=f32), w2).astype(bf16)

    return {
        "conv1_w": conv_block_diag(params["conv1_w"], 8, 32),     # (32, 128)
        "conv1_b": pad_to(params["conv1_b"], (8,)).reshape(8, 1).astype(f32),
        "conv2_w": conv_block_diag(params["conv2_w"], 16, 152),   # (64, 608)
        "conv2_b": params["conv2_b"].reshape(16, 1).astype(f32),
        "fc1_w": params["fc1_w"].astype(bf16),                      # (120, 400)
        "fc1_b": params["fc1_b"].reshape(120, 1).astype(f32),
        "fc2_w": pad_to(params["fc2_w"], (88, 120)).astype(bf16),   # (88, 120)
        "fc2_b": pad_to(params["fc2_b"], (88,)).reshape(88, 1).astype(f32),
        "fc3_w": pad_to(params["fc3_w"], (16, 88)).astype(bf16),    # (16, 88)
        "fc3_b": pad_to(params["fc3_b"], (16,)).reshape(16, 1).astype(f32),
    }


# Pure-JAX f32 reference (matches the PyTorch module) for tolerance checking.
def lenet_reference(x, params):
    dn = ("NCHW", "OIHW", "NCHW")
    y = jax.lax.conv_general_dilated(x, params["conv1_w"], (1, 1),
                                     ((2, 2), (2, 2)), dimension_numbers=dn)
    y = jax.nn.relu(y + params["conv1_b"].reshape(1, -1, 1, 1))
    y = jax.lax.reduce_window(y, -jnp.inf, jax.lax.max,
                              (1, 1, 2, 2), (1, 1, 2, 2), "VALID")
    y = jax.lax.conv_general_dilated(y, params["conv2_w"], (1, 1), "VALID",
                                     dimension_numbers=dn)
    y = jax.nn.relu(y + params["conv2_b"].reshape(1, -1, 1, 1))
    y = jax.lax.reduce_window(y, -jnp.inf, jax.lax.max,
                              (1, 1, 2, 2), (1, 1, 2, 2), "VALID")
    y = y.reshape(y.shape[0], -1)
    y = jax.nn.relu(y @ params["fc1_w"].T + params["fc1_b"])
    y = jax.nn.relu(y @ params["fc2_w"].T + params["fc2_b"])
    return y @ params["fc3_w"].T + params["fc3_b"]


if __name__ == "__main__":
    key = jax.random.PRNGKey(0)
    k_x, k_p = jax.random.split(key)

    # MNIST-shaped input (LeNet's fc1 assumes 28x28 single-channel input).
    batch = 2
    x = jax.random.normal(k_x, (batch, 1, 28, 28), jnp.float32)
    params = init_params(k_p)
    prepared = prepare_params(params)

    out = jax.jit(lenet_forward)(x, prepared)
    out = jax.block_until_ready(out)
    assert out.shape == (batch, 10), out.shape
    assert out.dtype == jnp.float32

    # bf16 MXU operands / bf16 intermediate activations, f32 accumulation:
    # allow small deviation vs the f32 reference.
    ref = jax.block_until_ready(lenet_reference(x, params))
    err = float(jnp.max(jnp.abs(out - ref)))
    assert err < 0.1, f"max abs err vs f32 reference too large: {err}"

    print("KERNEL_OK")
</pallas_src>

<mosaic_0001>
module attributes {stable_mosaic.version = 11 : i64} {
  func.func @_conv_relu_pool_kernel(%arg0: i32, %arg1: memref<32x128xbf16, #tpu.memory_space<vmem>>, %arg2: memref<8x1xf32, #tpu.memory_space<vmem>>, %arg3: memref<128x256xbf16, #tpu.memory_space<vmem>>, %arg4: memref<8x256xbf16, #tpu.memory_space<vmem>>) attributes {dimension_semantics = [#tpu.dimension_semantics<parallel>], iteration_bounds = array<i64: 2>, scalar_prefetch = 0 : i64, scratch_operands = 0 : i64, tpu.core_type = #tpu.core_type<tc>, window_params = [{pipeline_mode = #tpu.pipeline_mode<synchronous>, transform_indices = @transform_0, window_bounds = array<i64: 32, 128>}, {pipeline_mode = #tpu.pipeline_mode<synchronous>, transform_indices = @transform_1, window_bounds = array<i64: 8, 1>}, {transform_indices = @transform_2, window_bounds = array<i64: 128, 256>}, {transform_indices = @transform_3, window_bounds = array<i64: 8, 256>}]} {
    %c0 = arith.constant 0 : index
    %c0_0 = arith.constant 0 : index
    %0 = vector.load %arg1[%c0, %c0_0] : memref<32x128xbf16, #tpu.memory_space<vmem>>, vector<32x128xbf16>
    %c0_1 = arith.constant 0 : index
    %c0_2 = arith.constant 0 : index
    %1 = vector.load %arg3[%c0_1, %c0_2] : memref<128x256xbf16, #tpu.memory_space<vmem>>, vector<128x256xbf16>
    %cst = arith.constant dense<0.000000e+00> : vector<32x256xf32>
    %2 = tpu.matmul %0, %1, %cst {dimension_numbers = #tpu.dot_dimension_numbers<[1], [0], [0], [1], [0, 0, 1, 1], [], []>} : vector<32x128xbf16>, vector<128x256xbf16>, vector<32x256xf32> -> vector<32x256xf32>
    %3 = vector.extract_strided_slice %2 {offsets = [0, 0], sizes = [8, 256], strides = [1, 1]} : vector<32x256xf32> to vector<8x256xf32>
    %4 = vector.extract_strided_slice %2 {offsets = [8, 0], sizes = [8, 256], strides = [1, 1]} : vector<32x256xf32> to vector<8x256xf32>
    %5 = arith.maximumf %3, %4 : vector<8x256xf32>
    %6 = vector.extract_strided_slice %2 {offsets = [16, 0], sizes = [8, 256], strides = [1, 1]} : vector<32x256xf32> to vector<8x256xf32>
    %7 = vector.extract_strided_slice %2 {offsets = [24, 0], sizes = [8, 256], strides = [1, 1]} : vector<32x256xf32> to vector<8x256xf32>
    %8 = arith.maximumf %6, %7 : vector<8x256xf32>
    %9 = arith.maximumf %5, %8 : vector<8x256xf32>
    %c0_3 = arith.constant 0 : index
    %c0_4 = arith.constant 0 : index
    %10 = vector.load %arg2[%c0_3, %c0_4] : memref<8x1xf32, #tpu.memory_space<vmem>>, vector<8x1xf32>
    %11 = vector.broadcast %10 : vector<8x1xf32> to vector<8x256xf32>
    %12 = arith.addf %9, %11 : vector<8x256xf32>
    %cst_5 = arith.constant 0.000000e+00 : f32
    %13 = vector.broadcast %cst_5 : f32 to vector<8x256xf32>
    %14 = arith.maximumf %12, %13 : vector<8x256xf32>
    %15 = arith.truncf %14 : vector<8x256xf32> to vector<8x256xbf16>
    %c0_6 = arith.constant 0 : index
    %c0_7 = arith.constant 0 : index
    %16 = vector.load %arg4[%c0_6, %c0_7] : memref<8x256xbf16, #tpu.memory_space<vmem>>, vector<8x256xbf16>
    tpu.vector_store %arg4[%c0_6, %c0_7], %15 {strides = array<i32>} : memref<8x256xbf16, #tpu.memory_space<vmem>>, vector<8x256xbf16>,
    return
  }
  func.func @transform_0(%arg0: i32) -> (i32, i32) {
    %c0_i32 = arith.constant 0 : i32
    %c0_i32_0 = arith.constant 0 : i32
    %c0_i32_1 = arith.constant 0 : i32
    return %c0_i32, %c0_i32_0 : i32, i32
  }
  func.func @transform_1(%arg0: i32) -> (i32, i32) {
    %c0_i32 = arith.constant 0 : i32
    %c0_i32_0 = arith.constant 0 : i32
    %c0_i32_1 = arith.constant 0 : i32
    return %c0_i32, %c0_i32_0 : i32, i32
  }
  func.func @transform_2(%arg0: i32) -> (i32, i32) {
    %c0_i32 = arith.constant 0 : i32
    %c0_i32_0 = arith.constant 0 : i32
    return %c0_i32, %arg0 : i32, i32
  }
  func.func @transform_3(%arg0: i32) -> (i32, i32) {
    %c0_i32 = arith.constant 0 : i32
    %c0_i32_0 = arith.constant 0 : i32
    return %c0_i32, %arg0 : i32, i32
  }
}

module attributes {stable_mosaic.version = 11 : i64} {
  func.func @_conv_relu_pool_kernel(%arg0: i32, %arg1: memref<64x608xbf16, #tpu.memory_space<vmem>>, %arg2: memref<16x1xf32, #tpu.memory_space<vmem>>, %arg3: memref<608x128xbf16, #tpu.memory_space<vmem>>, %arg4: memref<16x128xbf16, #tpu.memory_space<vmem>>) attributes {dimension_semantics = [#tpu.dimension_semantics<parallel>], iteration_bounds = array<i64: 1>, scalar_prefetch = 0 : i64, scratch_operands = 0 : i64, tpu.core_type = #tpu.core_type<tc>, window_params = [{pipeline_mode = #tpu.pipeline_mode<synchronous>, transform_indices = @transform_0, window_bounds = array<i64: 64, 608>}, {pipeline_mode = #tpu.pipeline_mode<synchronous>, transform_indices = @transform_1, window_bounds = array<i64: 16, 1>}, {transform_indices = @transform_2, window_bounds = array<i64: 608, 128>}, {transform_indices = @transform_3, window_bounds = array<i64: 16, 128>}]} {
    %c0 = arith.constant 0 : index
    %c0_0 = arith.constant 0 : index
    %0 = vector.load %arg1[%c0, %c0_0] : memref<64x608xbf16, #tpu.memory_space<vmem>>, vector<64x608xbf16>
    %c0_1 = arith.constant 0 : index
    %c0_2 = arith.constant 0 : index
    %1 = vector.load %arg3[%c0_1, %c0_2] : memref<608x128xbf16, #tpu.memory_space<vmem>>, vector<608x128xbf16>
    %cst = arith.constant dense<0.000000e+00> : vector<64x128xf32>
    %2 = tpu.matmul %0, %1, %cst {dimension_numbers = #tpu.dot_dimension_numbers<[1], [0], [0], [1], [0, 0, 1, 1], [], []>} : vector<64x608xbf16>, vector<608x128xbf16>, vector<64x128xf32> -> vector<64x128xf32>
    %3 = vector.extract_strided_slice %2 {offsets = [0, 0], sizes = [16, 128], strides = [1, 1]} : vector<64x128xf32> to vector<16x128xf32>
    %4 = vector.extract_strided_slice %2 {offsets = [16, 0], sizes = [16, 128], strides = [1, 1]} : vector<64x128xf32> to vector<16x128xf32>
    %5 = arith.maximumf %3, %4 : vector<16x128xf32>
    %6 = vector.extract_strided_slice %2 {offsets = [32, 0], sizes = [16, 128], strides = [1, 1]} : vector<64x128xf32> to vector<16x128xf32>
    %7 = vector.extract_strided_slice %2 {offsets = [48, 0], sizes = [16, 128], strides = [1, 1]} : vector<64x128xf32> to vector<16x128xf32>
    %8 = arith.maximumf %6, %7 : vector<16x128xf32>
    %9 = arith.maximumf %5, %8 : vector<16x128xf32>
    %c0_3 = arith.constant 0 : index
    %c0_4 = arith.constant 0 : index
    %10 = vector.load %arg2[%c0_3, %c0_4] : memref<16x1xf32, #tpu.memory_space<vmem>>, vector<16x1xf32>
    %11 = vector.broadcast %10 : vector<16x1xf32> to vector<16x128xf32>
    %12 = arith.addf %9, %11 : vector<16x128xf32>
    %cst_5 = arith.constant 0.000000e+00 : f32
    %13 = vector.broadcast %cst_5 : f32 to vector<16x128xf32>
    %14 = arith.maximumf %12, %13 : vector<16x128xf32>
    %15 = arith.truncf %14 : vector<16x128xf32> to vector<16x128xbf16>
    %c0_6 = arith.constant 0 : index
    %c0_7 = arith.constant 0 : index
    %16 = vector.load %arg4[%c0_6, %c0_7] : memref<16x128xbf16, #tpu.memory_space<vmem>>, vector<16x128xbf16>
    tpu.vector_store %arg4[%c0_6, %c0_7], %15 {strides = array<i32>} : memref<16x128xbf16, #tpu.memory_space<vmem>>, vector<16x128xbf16>,
    return
  }
  func.func @transform_0(%arg0: i32) -> (i32, i32) {
    %c0_i32 = arith.constant 0 : i32
    %c0_i32_0 = arith.constant 0 : i32
    %c0_i32_1 = arith.constant 0 : i32
    return %c0_i32, %c0_i32_0 : i32, i32
  }
  func.func @transform_1(%arg0: i32) -> (i32, i32) {
    %c0_i32 = arith.constant 0 : i32
    %c0_i32_0 = arith.constant 0 : i32
    %c0_i32_1 = arith.constant 0 : i32
    return %c0_i32, %c0_i32_0 : i32, i32
  }
  func.func @transform_2(%arg0: i32) -> (i32, i32) {
    %c0_i32 = arith.constant 0 : i32
    %c0_i32_0 = arith.constant 0 : i32
    return %c0_i32, %arg0 : i32, i32
  }
  func.func @transform_3(%arg0: i32) -> (i32, i32) {
    %c0_i32 = arith.constant 0 : i32
    %c0_i32_0 = arith.constant 0 : i32
    return %c0_i32, %arg0 : i32, i32
  }
}

module attributes {stable_mosaic.version = 11 : i64} {
  func.func @_fc_stack_kernel(%arg0: i32, %arg1: memref<120x400xbf16, #tpu.memory_space<vmem>>, %arg2: memref<120x1xf32, #tpu.memory_space<vmem>>, %arg3: memref<88x120xbf16, #tpu.memory_space<vmem>>, %arg4: memref<88x1xf32, #tpu.memory_space<vmem>>, %arg5: memref<16x88xbf16, #tpu.memory_space<vmem>>, %arg6: memref<16x1xf32, #tpu.memory_space<vmem>>, %arg7: memref<400x128xbf16, #tpu.memory_space<vmem>>, %arg8: memref<16x128xf32, #tpu.memory_space<vmem>>) attributes {dimension_semantics = [#tpu.dimension_semantics<parallel>], iteration_bounds = array<i64: 1>, scalar_prefetch = 0 : i64, scratch_operands = 0 : i64, tpu.core_type = #tpu.core_type<tc>, window_params = [{pipeline_mode = #tpu.pipeline_mode<synchronous>, transform_indices = @transform_0, window_bounds = array<i64: 120, 400>}, {pipeline_mode = #tpu.pipeline_mode<synchronous>, transform_indices = @transform_1, window_bounds = array<i64: 120, 1>}, {pipeline_mode = #tpu.pipeline_mode<synchronous>, transform_indices = @transform_2, window_bounds = array<i64: 88, 120>}, {pipeline_mode = #tpu.pipeline_mode<synchronous>, transform_indices = @transform_3, window_bounds = array<i64: 88, 1>}, {pipeline_mode = #tpu.pipeline_mode<synchronous>, transform_indices = @transform_4, window_bounds = array<i64: 16, 88>}, {pipeline_mode = #tpu.pipeline_mode<synchronous>, transform_indices = @transform_5, window_bounds = array<i64: 16, 1>}, {transform_indices = @transform_6, window_bounds = array<i64: 400, 128>}, {transform_indices = @transform_7, window_bounds = array<i64: 16, 128>}]} {
    %c0 = arith.constant 0 : index
    %c0_0 = arith.constant 0 : index
    %0 = vector.load %arg1[%c0, %c0_0] : memref<120x400xbf16, #tpu.memory_space<vmem>>, vector<120x400xbf16>
    %c0_1 = arith.constant 0 : index
    %c0_2 = arith.constant 0 : index
    %1 = vector.load %arg7[%c0_1, %c0_2] : memref<400x128xbf16, #tpu.memory_space<vmem>>, vector<400x128xbf16>
    %cst = arith.constant dense<0.000000e+00> : vector<120x128xf32>
    %2 = tpu.matmul %0, %1, %cst {dimension_numbers = #tpu.dot_dimension_numbers<[1], [0], [0], [1], [0, 0, 1, 1], [], []>} : vector<120x400xbf16>, vector<400x128xbf16>, vector<120x128xf32> -> vector<120x128xf32>
    %c0_3 = arith.constant 0 : index
    %c0_4 = arith.constant 0 : index
    %3 = vector.load %arg2[%c0_3, %c0_4] : memref<120x1xf32, #tpu.memory_space<vmem>>, vector<120x1xf32>
    %4 = vector.broadcast %3 : vector<120x1xf32> to vector<120x128xf32>
    %5 = arith.addf %2, %4 : vector<120x128xf32>
    %cst_5 = arith.constant 0.000000e+00 : f32
    %6 = vector.broadcast %cst_5 : f32 to vector<120x128xf32>
    %7 = arith.maximumf %5, %6 : vector<120x128xf32>
    %c0_6 = arith.constant 0 : index
    %c0_7 = arith.constant 0 : index
    %8 = vector.load %arg3[%c0_6, %c0_7] : memref<88x120xbf16, #tpu.memory_space<vmem>>, vector<88x120xbf16>
    %9 = arith.truncf %7 : vector<120x128xf32> to vector<120x128xbf16>
    %cst_8 = arith.constant dense<0.000000e+00> : vector<88x128xf32>
    %10 = tpu.matmul %8, %9, %cst_8 {dimension_numbers = #tpu.dot_dimension_numbers<[1], [0], [0], [1], [0, 0, 1, 1], [], []>} : vector<88x120xbf16>, vector<120x128xbf16>, vector<88x128xf32> -> vector<88x128xf32>
    %c0_9 = arith.constant 0 : index
    %c0_10 = arith.constant 0 : index
    %11 = vector.load %arg4[%c0_9, %c0_10] : memref<88x1xf32, #tpu.memory_space<vmem>>, vector<88x1xf32>
    %12 = vector.broadcast %11 : vector<88x1xf32> to vector<88x128xf32>
    %13 = arith.addf %10, %12 : vector<88x128xf32>
    %cst_11 = arith.constant 0.000000e+00 : f32
    %14 = vector.broadcast %cst_11 : f32 to vector<88x128xf32>
    %15 = arith.maximumf %13, %14 : vector<88x128xf32>
    %c0_12 = arith.constant 0 : index
    %c0_13 = arith.constant 0 : index
    %16 = vector.load %arg5[%c0_12, %c0_13] : memref<16x88xbf16, #tpu.memory_space<vmem>>, vector<16x88xbf16>
    %17 = arith.truncf %15 : vector<88x128xf32> to vector<88x128xbf16>
    %cst_14 = arith.constant dense<0.000000e+00> : vector<16x128xf32>
    %18 = tpu.matmul %16, %17, %cst_14 {dimension_numbers = #tpu.dot_dimension_numbers<[1], [0], [0], [1], [0, 0, 1, 1], [], []>} : vector<16x88xbf16>, vector<88x128xbf16>, vector<16x128xf32> -> vector<16x128xf32>
    %c0_15 = arith.constant 0 : index
    %c0_16 = arith.constant 0 : index
    %19 = vector.load %arg6[%c0_15, %c0_16] : memref<16x1xf32, #tpu.memory_space<vmem>>, vector<16x1xf32>
    %20 = vector.broadcast %19 : vector<16x1xf32> to vector<16x128xf32>
    %21 = arith.addf %18, %20 : vector<16x128xf32>
    %c0_17 = arith.constant 0 : index
    %c0_18 = arith.constant 0 : index
    %22 = vector.load %arg8[%c0_17, %c0_18] : memref<16x128xf32, #tpu.memory_space<vmem>>, vector<16x128xf32>
    tpu.vector_store %arg8[%c0_17, %c0_18], %21 {strides = array<i32>} : memref<16x128xf32, #tpu.memory_space<vmem>>, vector<16x128xf32>,
    return
  }
  func.func @transform_0(%arg0: i32) -> (i32, i32) {
    %c0_i32 = arith.constant 0 : i32
    %c0_i32_0 = arith.constant 0 : i32
    %c0_i32_1 = arith.constant 0 : i32
    return %c0_i32, %c0_i32_0 : i32, i32
  }
  func.func @transform_1(%arg0: i32) -> (i32, i32) {
    %c0_i32 = arith.constant 0 : i32
    %c0_i32_0 = arith.constant 0 : i32
    %c0_i32_1 = arith.constant 0 : i32
    return %c0_i32, %c0_i32_0 : i32, i32
  }
  func.func @transform_2(%arg0: i32) -> (i32, i32) {
    %c0_i32 = arith.constant 0 : i32
    %c0_i32_0 = arith.constant 0 : i32
    %c0_i32_1 = arith.constant 0 : i32
    return %c0_i32, %c0_i32_0 : i32, i32
  }
  func.func @transform_3(%arg0: i32) -> (i32, i32) {
    %c0_i32 = arith.constant 0 : i32
    %c0_i32_0 = arith.constant 0 : i32
    %c0_i32_1 = arith.constant 0 : i32
    return %c0_i32, %c0_i32_0 : i32, i32
  }
  func.func @transform_4(%arg0: i32) -> (i32, i32) {
    %c0_i32 = arith.constant 0 : i32
    %c0_i32_0 = arith.constant 0 : i32
    %c0_i32_1 = arith.constant 0 : i32
    return %c0_i32, %c0_i32_0 : i32, i32
  }
  func.func @transform_5(%arg0: i32) -> (i32, i32) {
    %c0_i32 = arith.constant 0 : i32
    %c0_i32_0 = arith.constant 0 : i32
    %c0_i32_1 = arith.constant 0 : i32
    return %c0_i32, %c0_i32_0 : i32, i32
  }
  func.func @transform_6(%arg0: i32) -> (i32, i32) {
    %c0_i32 = arith.constant 0 : i32
    %c0_i32_0 = arith.constant 0 : i32
    return %c0_i32, %arg0 : i32, i32
  }
  func.func @transform_7(%arg0: i32) -> (i32, i32) {
    %c0_i32 = arith.constant 0 : i32
    %c0_i32_0 = arith.constant 0 : i32
    return %c0_i32, %arg0 : i32, i32
  }
}

</mosaic_0001>

<llo_original>
// kernel: lenet_forward.3
$region0: #{lenet_forward.3}
  #allocation0 [shape = 'u32[]', space=smem, size = 0x4, offset = 0x4, fixed_abs, tag = 'smem constant byte address 0x4 - core index']
  #allocation1 [shape = 'u32[72,128]{1,0:T(1,128)}', space=vmem, size = 0x9000, scoped, tag = 'internal scratch']
  %s0 = inlined_call_operand.vmem [shape: bf16[32,128], index: 0, kind: input, shape index: {}]
  %s1 = inlined_call_operand.vmem [shape: f32[8,1], index: 1, kind: input, shape index: {}]
  %s2 = inlined_call_operand.vmem [shape: bf16[128,512], index: 2, kind: input, shape index: {}]
  %s3 = inlined_call_operand.vmem [shape: bf16[8,512], index: 3, kind: output, shape index: {}]
  %s4 = sld [smem:[#allocation0]]
  $region83: #{lenet_forward.3} parent=0
    _
  %s6 = ssub.s32 1, %s4
  %s7 = scalar_select 0, %s6, %s4
  $region1: #{lenet_forward.3} parent=0
    #allocation2 [shape = 'u8[131072]{0}', space=vmem, size = 0x20000, scoped, tag = 'input window, operand 2']
    loop: start=0, step=1, limit=4
    $region2: #{lenet_forward.3} parent=1 // loop_pre_header
      _
    $region3: #{lenet_forward.3} parent=1 // loop_header
      %s9 = sphi 0, %s13
      %p10 = scmp.ge.s32.totalorder %s9, 4
      %s17 = sphi 0, %s17
      %s19 = sphi 0, %s17
      %s20 = sphi 0, %s19
      %s34 = sphi 0, %s20
      %s38 = sphi 0, %s38
      %s40 = sphi 0, %s38
      %s41 = sphi 0, %s40
      %s55 = sphi 0, %s41
      %s61 = sphi 0, %s63
      %s64 = sphi 0, %s61
      %s65 = sphi 0, %s64
      %s81 = sphi 0, %s65
      %s87 = sphi 0, %s89
      %s90 = sphi 0, %s87
      %s91 = sphi 0, %s90
      %s107 = sphi 0, %s91
    $region4: #{lenet_forward.3} parent=1 // loop_header_branch
      %12 = sbr.rel (%p10) target = $region8
    $region5: #{lenet_forward.3} parent=1 // loop_body
      %s14 = ssub.s32 %s9, 1
      %s15 = ssub.s32 %s9, 2
      %s16 = sadd.s32 %s9, 1
      %s18 = sadd.s32 %s17, 1
      %p21 = scmp.eq.s32.totalorder %s9, 1
      %p22 = scmp.ne.s32.totalorder %s17, %s19
      %p23 = scmp.eq.s32.totalorder %s9, 0
      %p24 = por %p22, %p23
      %p25 = scmp.ne.s32.totalorder %s17, %s19
      %p26 = scmp.eq.s32.totalorder %s14, 1
      %p27 = por %p25, %p26
      %p28 = scmp.ne.s32.totalorder %s19, %s20
      %p29 = scmp.eq.s32.totalorder %s14, 0
      %p30 = por %p28, %p29
      %p31 = scmp.ne.s32.totalorder %s19, %s20
      %p32 = scmp.eq.s32.totalorder %s15, 1
      %p33 = por %p31, %p32
      %p35 = scmp.ne.s32.totalorder %s20, %s34
      %p36 = scmp.eq.s32.totalorder %s15, 0
      %p37 = por %p35, %p36
      %s39 = sadd.s32 %s38, 1
      %p42 = scmp.eq.s32.totalorder %s9, 1
      %p43 = scmp.ne.s32.totalorder %s38, %s40
      %p44 = scmp.eq.s32.totalorder %s9, 0
      %p45 = por %p43, %p44
      %p46 = scmp.ne.s32.totalorder %s38, %s40
      %p47 = scmp.eq.s32.totalorder %s14, 1
      %p48 = por %p46, %p47
      %p49 = scmp.ne.s32.totalorder %s40, %s41
      %p50 = scmp.eq.s32.totalorder %s14, 0
      %p51 = por %p49, %p50
      %p52 = scmp.ne.s32.totalorder %s40, %s41
      %p53 = scmp.eq.s32.totalorder %s15, 1
      %p54 = por %p52, %p53
      %p56 = scmp.ne.s32.totalorder %s41, %s55
      %p57 = scmp.eq.s32.totalorder %s15, 0
      %p58 = por %p56, %p57
      %s59 = ssub.s32 %s9, %s16
      %p60 = scmp.eq.s32.totalorder %s59, 0
      %s62 = sadd.s32 %s61, 1
      %s63 = scalar_select %p60, %s61, %s62
      %p66 = pneg %p60
      %p67 = scmp.eq.s32.totalorder %s9, 1
      %p68 = por %p66, %p67
      %p69 = scmp.ne.s32.totalorder %s61, %s64
      %p70 = scmp.eq.s32.totalorder %s9, 0
      %p71 = por %p69, %p70
      %p72 = scmp.ne.s32.totalorder %s61, %s64
      %p73 = scmp.eq.s32.totalorder %s14, 1
      %p74 = por %p72, %p73
      %p75 = scmp.ne.s32.totalorder %s64, %s65
      %p76 = scmp.eq.s32.totalorder %s14, 0
      %p77 = por %p75, %p76
      %p78 = scmp.ne.s32.totalorder %s64, %s65
      %p79 = scmp.eq.s32.totalorder %s15, 1
      %p80 = por %p78, %p79
      %p82 = scmp.ne.s32.totalorder %s65, %s81
      %p83 = scmp.eq.s32.totalorder %s15, 0
      %p84 = por %p82, %p83
      %s85 = ssub.s32 %s9, %s16
      %p86 = scmp.eq.s32.totalorder %s85, 0
      %s88 = sadd.s32 %s87, 1
      %s89 = scalar_select %p86, %s87, %s88
      %p92 = pneg %p86
      %p93 = scmp.eq.s32.totalorder %s9, 1
      %p94 = por %p92, %p93
      %p95 = scmp.ne.s32.totalorder %s87, %s90
      %p96 = scmp.eq.s32.totalorder %s9, 0
      %p97 = por %p95, %p96
      %p98 = scmp.ne.s32.totalorder %s87, %s90
      %p99 = scmp.eq.s32.totalorder %s14, 1
      %p100 = por %p98, %p99
      %p101 = scmp.ne.s32.totalorder %s90, %s91
      %p102 = scmp.eq.s32.totalorder %s14, 0
      %p103 = por %p101, %p102
      %p104 = scmp.ne.s32.totalorder %s90, %s91
      %p105 = scmp.eq.s32.totalorder %s15, 1
      %p106 = por %p104, %p105
      %p108 = scmp.ne.s32.totalorder %s91, %s107
      %p109 = scmp.eq.s32.totalorder %s15, 0
      %p110 = por %p108, %p109
      %p111 = scmp.le.s32.totalorder 1, %s9
      %p112 = scmp.lt.s32.totalorder %s9, 3
      %p113 = pnand %p111, %p112
      %p114 = pneg %p113
      // Predicated region
      $region9: #{lenet_forward.3} parent=5 // pred_check
        _
      $region10: #{lenet_forward.3} parent=5 // pred_check_branch
        %116 = sbr.rel (%p113) target = $region12
      $region11: #{lenet_forward.3} parent=5 // pred_region
        %s117 = ssub.s32 %s9, 1
        // Predicated region
        $region13: #{lenet_forward.3} parent=11 // pred_check
          %p118 = pneg %p30
        $region14: #{lenet_forward.3} parent=11 // pred_check_branch
          %120 = sbr.rel (%p118) target = $region16
        $region15: #{lenet_forward.3} parent=11 // pred_region
          _
        $region16: #{lenet_forward.3} parent=11 // pred_fallthru
          _
        // Predicated region
        $region17: #{lenet_forward.3} parent=11 // pred_check
          %p121 = pneg %p51
        $region18: #{lenet_forward.3} parent=11 // pred_check_branch
          %123 = sbr.rel (%p121) target = $region20
        $region19: #{lenet_forward.3} parent=11 // pred_region
          _
        $region20: #{lenet_forward.3} parent=11 // pred_fallthru
          _
      $region12: #{lenet_forward.3} parent=5 // pred_fallthru
        _
      %p124 = scmp.lt.s32.totalorder %s9, 2
      // Predicated region
      $region21: #{lenet_forward.3} parent=5 // pred_check
        %p125 = pneg %p124
      $region22: #{lenet_forward.3} parent=5 // pred_check_branch
        %127 = sbr.rel (%p125) target = $region24
      $region23: #{lenet_forward.3} parent=5 // pred_region
        // Predicated region
        $region25: #{lenet_forward.3} parent=23 // pred_check
          %p128 = pneg %p71
        $region26: #{lenet_forward.3} parent=23 // pred_check_branch
          %130 = sbr.rel (%p128) target = $region28
        $region27: #{lenet_forward.3} parent=23 // pred_region
          %s131 = sand.u32 %s61, 1
          %s132 = sand.u32 %s61, 1
          %s133 = smul.addr %s132, 128
          %s134 = scalar_lea.vmem [#allocation2], %s133
          %s135 = smul.u32 2, %s9
          %s136 = smul.addr %s135, 4
          %s137 = scalar_lea.vmem %s2, %s136
          // Predicated region
          $region29: #{lenet_forward.3} parent=27 // pred_check
            _
          $region30: #{lenet_forward.3} parent=27 // pred_check_branch
            %139 = sbr.rel (0) target = $region32
          $region31: #{lenet_forward.3} parent=27 // pred_region
            // Predicated region
            $region33: #{lenet_forward.3} parent=31 // pred_check
              _
            $region34: #{lenet_forward.3} parent=31 // pred_check_branch
              %141 = sbr.rel (0) target = $region36
            $region35: #{lenet_forward.3} parent=31 // pred_region
              // Predicated region
              $region48: #{lenet_forward.3} parent=35 // pred_check
                _
              $region49: #{lenet_forward.3} parent=35 // pred_check_branch
                %187 = sbr.rel (0) target = $region51
              $region50: #{lenet_forward.3} parent=35 // pred_region
                loop: start=0, step=1, limit=1
                $region52: #{lenet_forward.3} parent=50 // loop_pre_header
                  _
                $region53: #{lenet_forward.3} parent=50 // loop_header
                  %s189 = sphi 0, %s193
                  %p190 = scmp.ge.s32.totalorder %s189, 1
                  %s194 = sphi %s137, %s137
                  %s195 = sphi %s134, %s134
                $region54: #{lenet_forward.3} parent=50 // loop_header_branch
                  %192 = sbr.rel (%p190) target = $region58
                $region55: #{lenet_forward.3} parent=50 // loop_body
                  %v196 = vld [vmem:[%s194] sm:$0xff]
                  %197 = vst [vmem:[%s195] sm:$0xff] %v196
                  %v198 = vld [vmem:[%s194 + $0x10] sm:$0xff]
                  %199 = vst [vmem:[%s195 + $0x8] sm:$0xff] %v198
                  %v200 = vld [vmem:[%s194 + $0x20] sm:$0xff]
                  %201 = vst [vmem:[%s195 + $0x10] sm:$0xff] %v200
                  %v202 = vld [vmem:[%s194 + $0x30] sm:$0xff]
                  %203 = vst [vmem:[%s195 + $0x18] sm:$0xff] %v202
                  %v204 = vld [vmem:[%s194 + $0x40] sm:$0xff]
                  %205 = vst [vmem:[%s195 + $0x20] sm:$0xff] %v204
                  %v206 = vld [vmem:[%s194 + $0x50] sm:$0xff]
                  %207 = vst [vmem:[%s195 + $0x28] sm:$0xff] %v206
                  %v208 = vld [vmem:[%s194 + $0x60] sm:$0xff]
                  %209 = vst [vmem:[%s195 + $0x30] sm:$0xff] %v208
                  %v210 = vld [vmem:[%s194 + $0x70] sm:$0xff]
                  %211 = vst [vmem:[%s195 + $0x38] sm:$0xff] %v210
                  %v212 = vld [vmem:[%s194 + $0x80] sm:$0xff]
                  %213 = vst [vmem:[%s195 + $0x40] sm:$0xff] %v212
                  %v214 = vld [vmem:[%s194 + $0x90] sm:$0xff]
                  %215 = vst [vmem:[%s195 + $0x48] sm:$0xff] %v214
                  %v216 = vld [vmem:[%s194 + $0xa0] sm:$0xff]
                  %217 = vst [vmem:[%s195 + $0x50] sm:$0xff] %v216
                  %v218 = vld [vmem:[%s194 + $0xb0] sm:$0xff]
                  %219 = vst [vmem:[%s195 + $0x58] sm:$0xff] %v218
                  %v220 = vld [vmem:[%s194 + $0xc0] sm:$0xff]
                  %221 = vst [vmem:[%s195 + $0x60] sm:$0xff] %v220
                  %v222 = vld [vmem:[%s194 + $0xd0] sm:$0xff]
                  %223 = vst [vmem:[%s195 + $0x68] sm:$0xff] %v222
                  %v224 = vld [vmem:[%s194 + $0xe0] sm:$0xff]
                  %225 = vst [vmem:[%s195 + $0x70] sm:$0xff] %v224
                  %v226 = vld [vmem:[%s194 + $0xf0] sm:$0xff]
                  %227 = vst [vmem:[%s195 + $0x78] sm:$0xff] %v226
                $region56: #{lenet_forward.3} parent=50 // loop_footer
                  %s193 = sadd.s32 1, %s189
                $region57: #{lenet_forward.3} parent=50 // loop_footer_branch
                  %188 = sbr.rel target = $region53
                $region58: #{lenet_forward.3} parent=50 // loop_exit
                  _
              $region51: #{lenet_forward.3} parent=35 // pred_fallthru
                _
              // Predicated region
              $region59: #{lenet_forward.3} parent=35 // pred_check
                _
              $region60: #{lenet_forward.3} parent=35 // pred_check_branch
                %229 = sbr.rel target = $region62
              $region61: #{lenet_forward.3} parent=35 // pred_region
                _
              $region62: #{lenet_forward.3} parent=35 // pred_fallthru
                _
            $region36: #{lenet_forward.3} parent=31 // pred_fallthru
              _
            // Predicated region
            $region37: #{lenet_forward.3} parent=31 // pred_check
              _
            $region38: #{lenet_forward.3} parent=31 // pred_check_branch
              %143 = sbr.rel target = $region40
            $region39: #{lenet_forward.3} parent=31 // pred_region
              %s145 = ssub.s32 256, 1
              loop: start=0, step=1, limit=1
              $region41: #{lenet_forward.3} parent=39 // loop_pre_header
                _
              $region42: #{lenet_forward.3} parent=39 // loop_header
                %s147 = sphi 0, %s151
                %p148 = scmp.ge.s32.totalorder %s147, 1
                %s152 = sphi %s137, %s137
                %s153 = sphi %s134, %s134
              $region43: #{lenet_forward.3} parent=39 // loop_header_branch
                %150 = sbr.rel (%p148) target = $region47
              $region44: #{lenet_forward.3} parent=39 // loop_body
                %v154 = vld [vmem:[%s152] sm:%s145]
                %155 = vst [vmem:[%s153] sm:%s145] %v154
                %v156 = vld [vmem:[%s152 + $0x10] sm:%s145]
                %157 = vst [vmem:[%s153 + $0x8] sm:%s145] %v156
                %v158 = vld [vmem:[%s152 + $0x20] sm:%s145]
                %159 = vst [vmem:[%s153 + $0x10] sm:%s145] %v158
                %v160 = vld [vmem:[%s152 + $0x30] sm:%s145]
                %161 = vst [vmem:[%s153 + $0x18] sm:%s145] %v160
                %v162 = vld [vmem:[%s152 + $0x40] sm:%s145]
                %163 = vst [vmem:[%s153 + $0x20] sm:%s145] %v162
                %v164 = vld [vmem:[%s152 + $0x50] sm:%s145]
                %165 = vst [vmem:[%s153 + $0x28] sm:%s145] %v164
                %v166 = vld [vmem:[%s152 + $0x60] sm:%s145]
                %167 = vst [vmem:[%s153 + $0x30] sm:%s145] %v166
                %v168 = vld [vmem:[%s152 + $0x70] sm:%s145]
                %169 = vst [vmem:[%s153 + $0x38] sm:%s145] %v168
                %v170 = vld [vmem:[%s152 + $0x80] sm:%s145]
                %171 = vst [vmem:[%s153 + $0x40] sm:%s145] %v170
                %v172 = vld [vmem:[%s152 + $0x90] sm:%s145]
                %173 = vst [vmem:[%s153 + $0x48] sm:%s145] %v172
                %v174 = vld [vmem:[%s152 + $0xa0] sm:%s145]
                %175 = vst [vmem:[%s153 + $0x50] sm:%s145] %v174
                %v176 = vld [vmem:[%s152 + $0xb0] sm:%s145]
                %177 = vst [vmem:[%s153 + $0x58] sm:%s145] %v176
                %v178 = vld [vmem:[%s152 + $0xc0] sm:%s145]
                %179 = vst [vmem:[%s153 + $0x60] sm:%s145] %v178
                %v180 = vld [vmem:[%s152 + $0xd0] sm:%s145]
                %181 = vst [vmem:[%s153 + $0x68] sm:%s145] %v180
                %v182 = vld [vmem:[%s152 + $0xe0] sm:%s145]
                %183 = vst [vmem:[%s153 + $0x70] sm:%s145] %v182
                %v184 = vld [vmem:[%s152 + $0xf0] sm:%s145]
                %185 = vst [vmem:[%s153 + $0x78] sm:%s145] %v184
              $region45: #{lenet_forward.3} parent=39 // loop_footer
                %s151 = sadd.s32 1, %s147
              $region46: #{lenet_forward.3} parent=39 // loop_footer_branch
                %146 = sbr.rel target = $region42
              $region47: #{lenet_forward.3} parent=39 // loop_exit
                _
            $region40: #{lenet_forward.3} parent=31 // pred_fallthru
              _
          $region32: #{lenet_forward.3} parent=27 // pred_fallthru
            _
          %230 = vnop
        $region28: #{lenet_forward.3} parent=23 // pred_fallthru
          _
      $region24: #{lenet_forward.3} parent=5 // pred_fallthru
        _
      %p231 = scmp.le.s32.totalorder 1, %s9
      %p232 = scmp.lt.s32.totalorder %s9, 3
      %p233 = pnand %p231, %p232
      %p234 = pneg %p233
      // Predicated region
      $region63: #{lenet_forward.3} parent=5 // pred_check
        _
      $region64: #{lenet_forward.3} parent=5 // pred_check_branch
        %236 = sbr.rel (%p233) target = $region66
      $region65: #{lenet_forward.3} parent=5 // pred_region
        %s237 = ssub.s32 %s9, 1
        %s238 = sand.u32 %s64, 1
        %s239 = sand.u32 %s64, 1
        %s240 = smul.addr %s239, 128
        %s241 = scalar_lea.vmem [#allocation2], %s240
        // Predicated region
        $region67: #{lenet_forward.3} parent=65 // pred_check
          %p242 = pneg %p77
        $region68: #{lenet_forward.3} parent=65 // pred_check_branch
          %244 = sbr.rel (%p242) target = $region70
        $region69: #{lenet_forward.3} parent=65 // pred_region
          _
        $region70: #{lenet_forward.3} parent=65 // pred_fallthru
          _
        %p245 = pneg %p30
        %p246 = pneg %p27
        %p247 = pneg %p51
        %p248 = pneg %p48
        %s249 = sand.u32 %s64, 1
        %s250 = sand.u32 %s64, 1
        %s251 = smul.addr %s250, 128
        %s252 = scalar_lea.vmem [#allocation2], %s251
        %p253 = pneg %p77
        %p254 = pneg %p74
        %p255 = pneg %p103
        %p256 = pneg %p100
        %s257 = smul.u32 2, %s14
        %p258 = scmp.lt.s32.totalorder %s257, 3
        %s259 = scalar_select %p258, %s257, 3
        %s260 = smul.addr %s259, 4
        %s261 = scalar_lea.vmem %s3, %s260
        %s262 = smul.u32 2, %s14
        %s263 = smul.u32 2, %s14
        %p264 = scmp.lt.s32.totalorder %s263, 3
        %s265 = scalar_select %p264, %s263, 3
        %s266 = smul.addr %s265, 4
        %s267 = scalar_lea.vmem %s3, %s266
        %s268 = smul.u32 2, %s14
        %v269 = vld [vmem:[%s0] sm:$0xf]
        %v270 = vld [vmem:[%s0 + $0x4] sm:$0xf]
        %v271 = vld [vmem:[%s0 + $0x8] sm:$0xf]
        %v272 = vld [vmem:[%s0 + $0xc] sm:$0xf]
        %v273 = vld [vmem:[%s241] sm:$0xff]
        %v274 = vld [vmem:[%s241 + $0x8] sm:$0xff]
        %v275 = vld [vmem:[%s241 + $0x10] sm:$0xff]
        %v276 = vld [vmem:[%s241 + $0x18] sm:$0xff]
        %v277 = vld [vmem:[%s241 + $0x20] sm:$0xff]
        %v278 = vld [vmem:[%s241 + $0x28] sm:$0xff]
        %v279 = vld [vmem:[%s241 + $0x30] sm:$0xff]
        %v280 = vld [vmem:[%s241 + $0x38] sm:$0xff]
        %v281 = vld [vmem:[%s241 + $0x40] sm:$0xff]
        %v282 = vld [vmem:[%s241 + $0x48] sm:$0xff]
        %v283 = vld [vmem:[%s241 + $0x50] sm:$0xff]
        %v284 = vld [vmem:[%s241 + $0x58] sm:$0xff]
        %v285 = vld [vmem:[%s241 + $0x60] sm:$0xff]
        %v286 = vld [vmem:[%s241 + $0x68] sm:$0xff]
        %v287 = vld [vmem:[%s241 + $0x70] sm:$0xff]
        %v288 = vld [vmem:[%s241 + $0x78] sm:$0xff]
        %v293 = vunpack.c.l.b16 %v269
        %v294 = vunpack.c.l.b16 %v270
        %v295 = vunpack.c.l.b16 %v271
        %v296 = vunpack.c.l.b16 %v272
        %v297 = vpack.c.b16 %v294, %v293
        %v298 = vpack.c.b16 %v296, %v295
        %v317 = vunpack.c.l.b16 %v273
        %v318 = vunpack.c.h.b16 %v273
        %v319 = vunpack.c.l.b16 %v274
        %v320 = vunpack.c.h.b16 %v274
        %v321 = vunpack.c.l.b16 %v275
        %v322 = vunpack.c.h.b16 %v275
        %v323 = vunpack.c.l.b16 %v276
        %v324 = vunpack.c.h.b16 %v276
        %v325 = vunpack.c.l.b16 %v277
        %v326 = vunpack.c.h.b16 %v277
        %v327 = vunpack.c.l.b16 %v278
        %v328 = vunpack.c.h.b16 %v278
        %v329 = vunpack.c.l.b16 %v279
        %v330 = vunpack.c.h.b16 %v279
        %v331 = vunpack.c.l.b16 %v280
        %v332 = vunpack.c.h.b16 %v280
        %v333 = vunpack.c.l.b16 %v281
        %v334 = vunpack.c.h.b16 %v281
        %v335 = vunpack.c.l.b16 %v282
        %v336 = vunpack.c.h.b16 %v282
        %v337 = vunpack.c.l.b16 %v283
        %v338 = vunpack.c.h.b16 %v283
        %v339 = vunpack.c.l.b16 %v284
        %v340 = vunpack.c.h.b16 %v284
        %v341 = vunpack.c.l.b16 %v285
        %v342 = vunpack.c.h.b16 %v285
        %v343 = vunpack.c.l.b16 %v286
        %v344 = vunpack.c.h.b16 %v286
        %v345 = vunpack.c.l.b16 %v287
        %v346 = vunpack.c.h.b16 %v287
        %v347 = vunpack.c.l.b16 %v288
        %v348 = vunpack.c.h.b16 %v288
        %v349 = vpack.c.b16 %v319, %v317
        %v350 = vpack.c.b16 %v320, %v318
        %v351 = vpack.c.b16 %v323, %v321
        %v352 = vpack.c.b16 %v324, %v322
        %v353 = vpack.c.b16 %v327, %v325
        %v354 = vpack.c.b16 %v328, %v326
        %v355 = vpack.c.b16 %v331, %v329
        %v356 = vpack.c.b16 %v332, %v330
        %v357 = vpack.c.b16 %v335, %v333
        %v358 = vpack.c.b16 %v336, %v334
        %v359 = vpack.c.b16 %v339, %v337
        %v360 = vpack.c.b16 %v340, %v338
        %v361 = vpack.c.b16 %v343, %v341
        %v362 = vpack.c.b16 %v344, %v342
        %v363 = vpack.c.b16 %v347, %v345
        %v364 = vpack.c.b16 %v348, %v346
        %381 = vmatpush.bf16.msra.mxu0 %v363
        %382 = vmatpush.bf16.msra.mxu0 %v361
        %383 = vmatpush.bf16.msra.mxu0 %v359
        %384 = vmatpush.bf16.msra.mxu0 %v357
        %385 = vmatpush.bf16.msra.mxu0 %v355
        %386 = vmatpush.bf16.msra.mxu0 %v353
        %387 = vmatpush.bf16.msra.mxu0 %v351
        %388 = vmatpush.bf16.msra.mxu0 %v349
        %389 = vmatmul.bf16.gmra.mxu0 %v297
        %v390 = vpop.f32.mrf.mxu0
        %v391 = vadd.f32 0.0, %v390
        %v392 = vpop.f32.mrf.mxu0
        %v393 = vadd.f32 0.0, %v392
        %394 = vmatmul.bf16.gmra.mxu0 %v298
        %v395 = vpop.f32.mrf.mxu0
        %v396 = vadd.f32 0.0, %v395
        %v397 = vpop.f32.mrf.mxu0
        %v398 = vadd.f32 0.0, %v397
        %399 = vdwg.mxu0
        %400 = vmatpush.bf16.msra.mxu0 %v364
        %401 = vmatpush.bf16.msra.mxu0 %v362
        %402 = vmatpush.bf16.msra.mxu0 %v360
        %403 = vmatpush.bf16.msra.mxu0 %v358
        %404 = vmatpush.bf16.msra.mxu0 %v356
        %405 = vmatpush.bf16.msra.mxu0 %v354
        %406 = vmatpush.bf16.msra.mxu0 %v352
        %407 = vmatpush.bf16.msra.mxu0 %v350
        %408 = vmatmul.bf16.gmra.mxu0 %v297
        %v409 = vpop.f32.mrf.mxu0
        %v410 = vadd.f32 0.0, %v409
        %v411 = vpop.f32.mrf.mxu0
        %v412 = vadd.f32 0.0, %v411
        %413 = vmatmul.bf16.gmra.mxu0 %v298
        %v414 = vpop.f32.mrf.mxu0
        %v415 = vadd.f32 0.0, %v414
        %v416 = vpop.f32.mrf.mxu0
        %v417 = vadd.f32 0.0, %v416
        %418 = vdwg.mxu0
        %v419 = vmax.f32 %v391, %v393
        %v420 = vmax.f32 %v410, %v412
        %v421 = vmax.f32 %v396, %v398
        %v422 = vmax.f32 %v415, %v417
        %v423 = vmax.f32 %v419, %v421
        %v424 = vmax.f32 %v420, %v422
        %v425 = vld [vmem:[%s1] sm:$0xff]
        %427 = vset.pattern.permute.xlu0 0
        %428 = vperm.xlu0 %427, %v425
        %v429 = vpop.permute.xlu0 %428
        %v431 = vadd.f32 %v423, %v429
        %v432 = vadd.f32 %v424, %v429
        %v433 = vmax.f32 %v431, 0.0
        %v434 = vmax.f32 %v432, 0.0
        %v435 = vpack.c.bf16 %v434, %v433
        %436 = vst [vmem:[%s267] sm:$0xff] %v435
        %s437 = smul.u32 2, %s14
        %p438 = scmp.lt.s32.totalorder %s437, 3
        %s439 = scalar_select %p438, %s437, 3
        %s440 = smul.addr %s439, 4
        %s441 = scalar_lea.vmem %s3, %s440
        // Predicated region
        $region71: #{lenet_forward.3} parent=65 // pred_check
          %p442 = pneg %p100
        $region72: #{lenet_forward.3} parent=65 // pred_check_branch
          %444 = sbr.rel (%p442) target = $region74
        $region73: #{lenet_forward.3} parent=65 // pred_region
          %s445 = smul.u32 2, %s14
        $region74: #{lenet_forward.3} parent=65 // pred_fallthru
          _
      $region66: #{lenet_forward.3} parent=5 // pred_fallthru
        _
      %p446 = scmp.le.s32.totalorder 2, %s9
      // Predicated region
      $region75: #{lenet_forward.3} parent=5 // pred_check
        %p447 = pneg %p446
      $region76: #{lenet_forward.3} parent=5 // pred_check_branch
        %449 = sbr.rel (%p447) target = $region78
      $region77: #{lenet_forward.3} parent=5 // pred_region
        %s450 = ssub.s32 %s9, 2
        // Predicated region
        $region79: #{lenet_forward.3} parent=77 // pred_check
          %p451 = pneg %p106
        $region80: #{lenet_forward.3} parent=77 // pred_check_branch
          %453 = sbr.rel (%p451) target = $region82
        $region81: #{lenet_forward.3} parent=77 // pred_region
          %s454 = smul.u32 2, %s15
          %p455 = scmp.lt.s32.totalorder %s454, 3
          %s456 = scalar_select %p455, %s454, 3
          %s457 = smul.addr %s456, 4
          %s458 = scalar_lea.vmem %s3, %s457
        $region82: #{lenet_forward.3} parent=77 // pred_fallthru
          _
      $region78: #{lenet_forward.3} parent=5 // pred_fallthru
        _
    $region6: #{lenet_forward.3} parent=1 // loop_footer
      %s13 = sadd.s32 1, %s9
    $region7: #{lenet_forward.3} parent=1 // loop_footer_branch
      %8 = sbr.rel target = $region3
    $region8: #{lenet_forward.3} parent=1 // loop_exit
      _

// kernel: lenet_forward.4
$region0: #{lenet_forward.4}
  #allocation0 [shape = 'u32[]', space=smem, size = 0x4, offset = 0x4, fixed_abs, tag = 'smem constant byte address 0x4 - core index']
  #allocation1 [shape = 'u32[72,128]{1,0:T(1,128)}', space=vmem, size = 0x9000, scoped, tag = 'internal scratch']
  %s0 = inlined_call_operand.vmem [shape: bf16[64,608], index: 0, kind: input, shape index: {}]
  %s1 = inlined_call_operand.vmem [shape: f32[16,1], index: 1, kind: input, shape index: {}]
  %s2 = inlined_call_operand.vmem [shape: bf16[608,128], index: 2, kind: input, shape index: {}]
  %s3 = inlined_call_operand.vmem [shape: bf16[16,128], index: 3, kind: output, shape index: {}]
  %s4 = sld [smem:[#allocation0]]
  $region22: #{lenet_forward.4} parent=0
    _
  %s6 = ssub.s32 1, %s4
  %s7 = scalar_select 0, %s6, %s4
  // Predicated region
  $region2: #{lenet_forward.4} parent=0 // pred_check
    _
  $region3: #{lenet_forward.4} parent=0 // pred_check_branch
    %9 = sbr.rel (0) target = $region5
  $region4: #{lenet_forward.4} parent=0 // pred_region
    _
  $region5: #{lenet_forward.4} parent=0 // pred_fallthru
    _
  // Predicated region
  $region6: #{lenet_forward.4} parent=0 // pred_check
    _
  $region7: #{lenet_forward.4} parent=0 // pred_check_branch
    %11 = sbr.rel (0) target = $region9
  $region8: #{lenet_forward.4} parent=0 // pred_region
    _
  $region9: #{lenet_forward.4} parent=0 // pred_fallthru
    _
  // Predicated region
  $region10: #{lenet_forward.4} parent=0 // pred_check
    _
  $region11: #{lenet_forward.4} parent=0 // pred_check_branch
    %13 = sbr.rel (0) target = $region13
  $region12: #{lenet_forward.4} parent=0 // pred_region
    _
  $region13: #{lenet_forward.4} parent=0 // pred_fallthru
    _
  %v15 = vld [vmem:[%s0] sm:$0xff]
  %v16 = vld [vmem:[%s0 + $0x8] sm:$0xff]
  %v17 = vld [vmem:[%s0 + $0x10] sm:$0xf]
  %v18 = vld [vmem:[%s0 + $0x14] sm:$0xff]
  %v19 = vld [vmem:[%s0 + $0x1c] sm:$0xff]
  %v20 = vld [vmem:[%s0 + $0x24] sm:$0xf]
  %v21 = vld [vmem:[%s0 + $0x28] sm:$0xff]
  %v22 = vld [vmem:[%s0 + $0x30] sm:$0xff]
  %v23 = vld [vmem:[%s0 + $0x38] sm:$0xf]
  %v24 = vld [vmem:[%s0 + $0x3c] sm:$0xff]
  %v25 = vld [vmem:[%s0 + $0x44] sm:$0xff]
  %v26 = vld [vmem:[%s0 + $0x4c] sm:$0xf]
  %v27 = vld [vmem:[%s0 + $0x50] sm:$0xff]
  %v28 = vld [vmem:[%s0 + $0x58] sm:$0xff]
  %v29 = vld [vmem:[%s0 + $0x60] sm:$0xf]
  %v30 = vld [vmem:[%s0 + $0x64] sm:$0xff]
  %v31 = vld [vmem:[%s0 + $0x6c] sm:$0xff]
  %v32 = vld [vmem:[%s0 + $0x74] sm:$0xf]
  %v33 = vld [vmem:[%s0 + $0x78] sm:$0xff]
  %v34 = vld [vmem:[%s0 + $0x80] sm:$0xff]
  %v35 = vld [vmem:[%s0 + $0x88] sm:$0xf]
  %v36 = vld [vmem:[%s0 + $0x8c] sm:$0xff]
  %v37 = vld [vmem:[%s0 + $0x94] sm:$0xff]
  %v38 = vld [vmem:[%s0 + $0x9c] sm:$0xf]
  %v39 = vld [vmem:[%s2] sm:$0xf]
  %v40 = vld [vmem:[%s2 + $0x4] sm:$0xf]
  %v41 = vld [vmem:[%s2 + $0x8] sm:$0xf]
  %v42 = vld [vmem:[%s2 + $0xc] sm:$0xf]
  %v43 = vld [vmem:[%s2 + $0x10] sm:$0xf]
  %v44 = vld [vmem:[%s2 + $0x14] sm:$0xf]
  %v45 = vld [vmem:[%s2 + $0x18] sm:$0xf]
  %v46 = vld [vmem:[%s2 + $0x1c] sm:$0xf]
  %v47 = vld [vmem:[%s2 + $0x20] sm:$0xf]
  %v48 = vld [vmem:[%s2 + $0x24] sm:$0xf]
  %v49 = vld [vmem:[%s2 + $0x28] sm:$0xf]
  %v50 = vld [vmem:[%s2 + $0x2c] sm:$0xf]
  %v51 = vld [vmem:[%s2 + $0x30] sm:$0xf]
  %v52 = vld [vmem:[%s2 + $0x34] sm:$0xf]
  %v53 = vld [vmem:[%s2 + $0x38] sm:$0xf]
  %v54 = vld [vmem:[%s2 + $0x3c] sm:$0xf]
  %v55 = vld [vmem:[%s2 + $0x40] sm:$0xf]
  %v56 = vld [vmem:[%s2 + $0x44] sm:$0xf]
  %v57 = vld [vmem:[%s2 + $0x48] sm:$0xf]
  %v58 = vld [vmem:[%s2 + $0x4c] sm:$0xf]
  %v59 = vld [vmem:[%s2 + $0x50] sm:$0xf]
  %v60 = vld [vmem:[%s2 + $0x54] sm:$0xf]
  %v61 = vld [vmem:[%s2 + $0x58] sm:$0xf]
  %v62 = vld [vmem:[%s2 + $0x5c] sm:$0xf]
  %v63 = vld [vmem:[%s2 + $0x60] sm:$0xf]
  %v64 = vld [vmem:[%s2 + $0x64] sm:$0xf]
  %v65 = vld [vmem:[%s2 + $0x68] sm:$0xf]
  %v66 = vld [vmem:[%s2 + $0x6c] sm:$0xf]
  %v67 = vld [vmem:[%s2 + $0x70] sm:$0xf]
  %v68 = vld [vmem:[%s2 + $0x74] sm:$0xf]
  %v69 = vld [vmem:[%s2 + $0x78] sm:$0xf]
  %v70 = vld [vmem:[%s2 + $0x7c] sm:$0xf]
  %v71 = vld [vmem:[%s2 + $0x80] sm:$0xf]
  %v72 = vld [vmem:[%s2 + $0x84] sm:$0xf]
  %v73 = vld [vmem:[%s2 + $0x88] sm:$0xf]
  %v74 = vld [vmem:[%s2 + $0x8c] sm:$0xf]
  %v75 = vld [vmem:[%s2 + $0x90] sm:$0xf]
  %v76 = vld [vmem:[%s2 + $0x94] sm:$0xf]
  %v77 = vld [vmem:[%s2 + $0x98] sm:$0xf]
  %v78 = vld [vmem:[%s2 + $0x9c] sm:$0xf]
  %v79 = vld [vmem:[%s2 + $0xa0] sm:$0xf]
  %v80 = vld [vmem:[%s2 + $0xa4] sm:$0xf]
  %v81 = vld [vmem:[%s2 + $0xa8] sm:$0xf]
  %v82 = vld [vmem:[%s2 + $0xac] sm:$0xf]
  %v83 = vld [vmem:[%s2 + $0xb0] sm:$0xf]
  %v84 = vld [vmem:[%s2 + $0xb4] sm:$0xf]
  %v85 = vld [vmem:[%s2 + $0xb8] sm:$0xf]
  %v86 = vld [vmem:[%s2 + $0xbc] sm:$0xf]
  %v87 = vld [vmem:[%s2 + $0xc0] sm:$0xf]
  %v88 = vld [vmem:[%s2 + $0xc4] sm:$0xf]
  %v89 = vld [vmem:[%s2 + $0xc8] sm:$0xf]
  %v90 = vld [vmem:[%s2 + $0xcc] sm:$0xf]
  %v91 = vld [vmem:[%s2 + $0xd0] sm:$0xf]
  %v92 = vld [vmem:[%s2 + $0xd4] sm:$0xf]
  %v93 = vld [vmem:[%s2 + $0xd8] sm:$0xf]
  %v94 = vld [vmem:[%s2 + $0xdc] sm:$0xf]
  %v95 = vld [vmem:[%s2 + $0xe0] sm:$0xf]
  %v96 = vld [vmem:[%s2 + $0xe4] sm:$0xf]
  %v97 = vld [vmem:[%s2 + $0xe8] sm:$0xf]
  %v98 = vld [vmem:[%s2 + $0xec] sm:$0xf]
  %v99 = vld [vmem:[%s2 + $0xf0] sm:$0xf]
  %v100 = vld [vmem:[%s2 + $0xf4] sm:$0xf]
  %v101 = vld [vmem:[%s2 + $0xf8] sm:$0xf]
  %v102 = vld [vmem:[%s2 + $0xfc] sm:$0xf]
  %v103 = vld [vmem:[%s2 + $0x100] sm:$0xf]
  %v104 = vld [vmem:[%s2 + $0x104] sm:$0xf]
  %v105 = vld [vmem:[%s2 + $0x108] sm:$0xf]
  %v106 = vld [vmem:[%s2 + $0x10c] sm:$0xf]
  %v107 = vld [vmem:[%s2 + $0x110] sm:$0xf]
  %v108 = vld [vmem:[%s2 + $0x114] sm:$0xf]
  %v109 = vld [vmem:[%s2 + $0x118] sm:$0xf]
  %v110 = vld [vmem:[%s2 + $0x11c] sm:$0xf]
  %v111 = vld [vmem:[%s2 + $0x120] sm:$0xf]
  %v112 = vld [vmem:[%s2 + $0x124] sm:$0xf]
  %v113 = vld [vmem:[%s2 + $0x128] sm:$0xf]
  %v114 = vld [vmem:[%s2 + $0x12c] sm:$0xf]
  %v139 = vunpack.c.l.b16 %v15
  %v140 = vunpack.c.h.b16 %v15
  %v141 = vunpack.c.l.b16 %v16
  %v142 = vunpack.c.h.b16 %v16
  %v143 = vunpack.c.l.b16 %v17
  %v144 = vunpack.c.l.b16 %v18
  %v145 = vunpack.c.h.b16 %v18
  %v146 = vunpack.c.l.b16 %v19
  %v147 = vunpack.c.h.b16 %v19
  %v148 = vunpack.c.l.b16 %v20
  %v149 = vunpack.c.l.b16 %v21
  %v150 = vunpack.c.h.b16 %v21
  %v151 = vunpack.c.l.b16 %v22
  %v152 = vunpack.c.h.b16 %v22
  %v153 = vunpack.c.l.b16 %v23
  %v154 = vunpack.c.l.b16 %v24
  %v155 = vunpack.c.h.b16 %v24
  %v156 = vunpack.c.l.b16 %v25
  %v157 = vunpack.c.h.b16 %v25
  %v158 = vunpack.c.l.b16 %v26
  %v159 = vunpack.c.l.b16 %v27
  %v160 = vunpack.c.h.b16 %v27
  %v161 = vunpack.c.l.b16 %v28
  %v162 = vunpack.c.h.b16 %v28
  %v163 = vunpack.c.l.b16 %v29
  %v164 = vunpack.c.l.b16 %v30
  %v165 = vunpack.c.h.b16 %v30
  %v166 = vunpack.c.l.b16 %v31
  %v167 = vunpack.c.h.b16 %v31
  %v168 = vunpack.c.l.b16 %v32
  %v169 = vunpack.c.l.b16 %v33
  %v170 = vunpack.c.h.b16 %v33
  %v171 = vunpack.c.l.b16 %v34
  %v172 = vunpack.c.h.b16 %v34
  %v173 = vunpack.c.l.b16 %v35
  %v174 = vunpack.c.l.b16 %v36
  %v175 = vunpack.c.h.b16 %v36
  %v176 = vunpack.c.l.b16 %v37
  %v177 = vunpack.c.h.b16 %v37
  %v178 = vunpack.c.l.b16 %v38
  %v179 = vpack.c.b16 %v144, %v139
  %v180 = vpack.c.b16 %v145, %v140
  %v181 = vpack.c.b16 %v146, %v141
  %v182 = vpack.c.b16 %v147, %v142
  %v183 = vpack.c.b16 %v148, %v143
  %v184 = vpack.c.b16 %v154, %v149
  %v185 = vpack.c.b16 %v155, %v150
  %v186 = vpack.c.b16 %v156, %v151
  %v187 = vpack.c.b16 %v157, %v152
  %v188 = vpack.c.b16 %v158, %v153
  %v189 = vpack.c.b16 %v164, %v159
  %v190 = vpack.c.b16 %v165, %v160
  %v191 = vpack.c.b16 %v166, %v161
  %v192 = vpack.c.b16 %v167, %v162
  %v193 = vpack.c.b16 %v168, %v163
  %v194 = vpack.c.b16 %v174, %v169
  %v195 = vpack.c.b16 %v175, %v170
  %v196 = vpack.c.b16 %v176, %v171
  %v197 = vpack.c.b16 %v177, %v172
  %v198 = vpack.c.b16 %v178, %v173
  %v291 = vunpack.c.l.b16 %v39
  %v292 = vunpack.c.l.b16 %v40
  %v293 = vunpack.c.l.b16 %v41
  %v294 = vunpack.c.l.b16 %v42
  %v295 = vunpack.c.l.b16 %v43
  %v296 = vunpack.c.l.b16 %v44
  %v297 = vunpack.c.l.b16 %v45
  %v298 = vunpack.c.l.b16 %v46
  %v299 = vunpack.c.l.b16 %v47
  %v300 = vunpack.c.l.b16 %v48
  %v301 = vunpack.c.l.b16 %v49
  %v302 = vunpack.c.l.b16 %v50
  %v303 = vunpack.c.l.b16 %v51
  %v304 = vunpack.c.l.b16 %v52
  %v305 = vunpack.c.l.b16 %v53
  %v306 = vunpack.c.l.b16 %v54
  %v307 = vunpack.c.l.b16 %v55
  %v308 = vunpack.c.l.b16 %v56
  %v309 = vunpack.c.l.b16 %v57
  %v310 = vunpack.c.l.b16 %v58
  %v311 = vunpack.c.l.b16 %v59
  %v312 = vunpack.c.l.b16 %v60
  %v313 = vunpack.c.l.b16 %v61
  %v314 = vunpack.c.l.b16 %v62
  %v315 = vunpack.c.l.b16 %v63
  %v316 = vunpack.c.l.b16 %v64
  %v317 = vunpack.c.l.b16 %v65
  %v318 = vunpack.c.l.b16 %v66
  %v319 = vunpack.c.l.b16 %v67
  %v320 = vunpack.c.l.b16 %v68
  %v321 = vunpack.c.l.b16 %v69
  %v322 = vunpack.c.l.b16 %v70
  %v323 = vunpack.c.l.b16 %v71
  %v324 = vunpack.c.l.b16 %v72
  %v325 = vunpack.c.l.b16 %v73
  %v326 = vunpack.c.l.b16 %v74
  %v327 = vunpack.c.l.b16 %v75
  %v328 = vunpack.c.l.b16 %v76
  %v329 = vunpack.c.l.b16 %v77
  %v330 = vunpack.c.l.b16 %v78
  %v331 = vunpack.c.l.b16 %v79
  %v332 = vunpack.c.l.b16 %v80
  %v333 = vunpack.c.l.b16 %v81
  %v334 = vunpack.c.l.b16 %v82
  %v335 = vunpack.c.l.b16 %v83
  %v336 = vunpack.c.l.b16 %v84
  %v337 = vunpack.c.l.b16 %v85
  %v338 = vunpack.c.l.b16 %v86
  %v339 = vunpack.c.l.b16 %v87
  %v340 = vunpack.c.l.b16 %v88
  %v341 = vunpack.c.l.b16 %v89
  %v342 = vunpack.c.l.b16 %v90
  %v343 = vunpack.c.l.b16 %v91
  %v344 = vunpack.c.l.b16 %v92
  %v345 = vunpack.c.l.b16 %v93
  %v346 = vunpack.c.l.b16 %v94
  %v347 = vunpack.c.l.b16 %v95
  %v348 = vunpack.c.l.b16 %v96
  %v349 = vunpack.c.l.b16 %v97
  %v350 = vunpack.c.l.b16 %v98
  %v351 = vunpack.c.l.b16 %v99
  %v352 = vunpack.c.l.b16 %v100
  %v353 = vunpack.c.l.b16 %v101
  %v354 = vunpack.c.l.b16 %v102
  %v355 = vunpack.c.l.b16 %v103
  %v356 = vunpack.c.l.b16 %v104
  %v357 = vunpack.c.l.b16 %v105
  %v358 = vunpack.c.l.b16 %v106
  %v359 = vunpack.c.l.b16 %v107
  %v360 = vunpack.c.l.b16 %v108
  %v361 = vunpack.c.l.b16 %v109
  %v362 = vunpack.c.l.b16 %v110
  %v363 = vunpack.c.l.b16 %v111
  %v364 = vunpack.c.l.b16 %v112
  %v365 = vunpack.c.l.b16 %v113
  %v366 = vunpack.c.l.b16 %v114
  %v367 = vpack.c.b16 %v292, %v291
  %v368 = vpack.c.b16 %v294, %v293
  %v369 = vpack.c.b16 %v296, %v295
  %v370 = vpack.c.b16 %v298, %v297
  %v371 = vpack.c.b16 %v300, %v299
  %v372 = vpack.c.b16 %v302, %v301
  %v373 = vpack.c.b16 %v304, %v303
  %v374 = vpack.c.b16 %v306, %v305
  %v375 = vpack.c.b16 %v308, %v307
  %v376 = vpack.c.b16 %v310, %v309
  %v377 = vpack.c.b16 %v312, %v311
  %v378 = vpack.c.b16 %v314, %v313
  %v379 = vpack.c.b16 %v316, %v315
  %v380 = vpack.c.b16 %v318, %v317
  %v381 = vpack.c.b16 %v320, %v319
  %v382 = vpack.c.b16 %v322, %v321
  %v383 = vpack.c.b16 %v324, %v323
  %v384 = vpack.c.b16 %v326, %v325
  %v385 = vpack.c.b16 %v328, %v327
  %v386 = vpack.c.b16 %v330, %v329
  %v387 = vpack.c.b16 %v332, %v331
  %v388 = vpack.c.b16 %v334, %v333
  %v389 = vpack.c.b16 %v336, %v335
  %v390 = vpack.c.b16 %v338, %v337
  %v391 = vpack.c.b16 %v340, %v339
  %v392 = vpack.c.b16 %v342, %v341
  %v393 = vpack.c.b16 %v344, %v343
  %v394 = vpack.c.b16 %v346, %v345
  %v395 = vpack.c.b16 %v348, %v347
  %v396 = vpack.c.b16 %v350, %v349
  %v397 = vpack.c.b16 %v352, %v351
  %v398 = vpack.c.b16 %v354, %v353
  %v399 = vpack.c.b16 %v356, %v355
  %v400 = vpack.c.b16 %v358, %v357
  %v401 = vpack.c.b16 %v360, %v359
  %v402 = vpack.c.b16 %v362, %v361
  %v403 = vpack.c.b16 %v364, %v363
  %v404 = vpack.c.b16 %v366, %v365
  %vm443 = vcmask 785408
  %v445 = vsel %vm443, %v183, 0
  %v448 = vsel %vm443, %v188, 0
  %v451 = vsel %vm443, %v193, 0
  %v454 = vsel %vm443, %v198, 0
  %456 = vmatpush.bf16.msra.mxu0 %v374
  %457 = vmatpush.bf16.msra.mxu0 %v373
  %458 = vmatpush.bf16.msra.mxu0 %v372
  %459 = vmatpush.bf16.msra.mxu0 %v371
  %460 = vmatpush.bf16.msra.mxu0 %v370
  %461 = vmatpush.bf16.msra.mxu0 %v369
  %462 = vmatpush.bf16.msra.mxu0 %v368
  %463 = vmatpush.bf16.msra.mxu0 %v367
  %464 = vmatmul.bf16.gmra.mxu0 %v179
  %v465 = vpop.f32.mrf.mxu0
  %v466 = vadd.f32 0.0, %v465
  %v467 = vpop.f32.mrf.mxu0
  %v468 = vadd.f32 0.0, %v467
  %469 = vmatmul.bf16.gmra.mxu0 %v184
  %v470 = vpop.f32.mrf.mxu0
  %v471 = vadd.f32 0.0, %v470
  %v472 = vpop.f32.mrf.mxu0
  %v473 = vadd.f32 0.0, %v472
  %474 = vmatmul.bf16.gmra.mxu0 %v189
  %v475 = vpop.f32.mrf.mxu0
  %v476 = vadd.f32 0.0, %v475
  %v477 = vpop.f32.mrf.mxu0
  %v478 = vadd.f32 0.0, %v477
  %479 = vmatmul.bf16.gmra.mxu0 %v194
  %v480 = vpop.f32.mrf.mxu0
  %v481 = vadd.f32 0.0, %v480
  %v482 = vpop.f32.mrf.mxu0
  %v483 = vadd.f32 0.0, %v482
  %484 = vdwg.mxu0
  %485 = vmatpush.bf16.msra.mxu0 %v382
  %486 = vmatpush.bf16.msra.mxu0 %v381
  %487 = vmatpush.bf16.msra.mxu0 %v380
  %488 = vmatpush.bf16.msra.mxu0 %v379
  %489 = vmatpush.bf16.msra.mxu0 %v378
  %490 = vmatpush.bf16.msra.mxu0 %v377
  %491 = vmatpush.bf16.msra.mxu0 %v376
  %492 = vmatpush.bf16.msra.mxu0 %v375
  %493 = vmatmul.bf16.gmra.mxu0 %v180
  %v494 = vpop.f32.mrf.mxu0
  %v495 = vadd.f32 %v466, %v494
  %v496 = vpop.f32.mrf.mxu0
  %v497 = vadd.f32 %v468, %v496
  %498 = vmatmul.bf16.gmra.mxu0 %v185
  %v499 = vpop.f32.mrf.mxu0
  %v500 = vadd.f32 %v471, %v499
  %v501 = vpop.f32.mrf.mxu0
  %v502 = vadd.f32 %v473, %v501
  %503 = vmatmul.bf16.gmra.mxu0 %v190
  %v504 = vpop.f32.mrf.mxu0
  %v505 = vadd.f32 %v476, %v504
  %v506 = vpop.f32.mrf.mxu0
  %v507 = vadd.f32 %v478, %v506
  %508 = vmatmul.bf16.gmra.mxu0 %v195
  %v509 = vpop.f32.mrf.mxu0
  %v510 = vadd.f32 %v481, %v509
  %v511 = vpop.f32.mrf.mxu0
  %v512 = vadd.f32 %v483, %v511
  %513 = vdwg.mxu0
  %514 = vmatpush.bf16.msra.mxu0 %v390
  %515 = vmatpush.bf16.msra.mxu0 %v389
  %516 = vmatpush.bf16.msra.mxu0 %v388
  %517 = vmatpush.bf16.msra.mxu0 %v387
  %518 = vmatpush.bf16.msra.mxu0 %v386
  %519 = vmatpush.bf16.msra.mxu0 %v385
  %520 = vmatpush.bf16.msra.mxu0 %v384
  %521 = vmatpush.bf16.msra.mxu0 %v383
  %522 = vmatmul.bf16.gmra.mxu0 %v181
  %v523 = vpop.f32.mrf.mxu0
  %v524 = vadd.f32 %v495, %v523
  %v525 = vpop.f32.mrf.mxu0
  %v526 = vadd.f32 %v497, %v525
  %527 = vmatmul.bf16.gmra.mxu0 %v186
  %v528 = vpop.f32.mrf.mxu0
  %v529 = vadd.f32 %v500, %v528
  %v530 = vpop.f32.mrf.mxu0
  %v531 = vadd.f32 %v502, %v530
  %532 = vmatmul.bf16.gmra.mxu0 %v191
  %v533 = vpop.f32.mrf.mxu0
  %v534 = vadd.f32 %v505, %v533
  %v535 = vpop.f32.mrf.mxu0
  %v536 = vadd.f32 %v507, %v535
  %537 = vmatmul.bf16.gmra.mxu0 %v196
  %v538 = vpop.f32.mrf.mxu0
  %v539 = vadd.f32 %v510, %v538
  %v540 = vpop.f32.mrf.mxu0
  %v541 = vadd.f32 %v512, %v540
  %542 = vdwg.mxu0
  %543 = vmatpush.bf16.msra.mxu0 %v398
  %544 = vmatpush.bf16.msra.mxu0 %v397
  %545 = vmatpush.bf16.msra.mxu0 %v396
  %546 = vmatpush.bf16.msra.mxu0 %v395
  %547 = vmatpush.bf16.msra.mxu0 %v394
  %548 = vmatpush.bf16.msra.mxu0 %v393
  %549 = vmatpush.bf16.msra.mxu0 %v392
  %550 = vmatpush.bf16.msra.mxu0 %v391
  %551 = vmatmul.bf16.gmra.mxu0 %v182
  %v552 = vpop.f32.mrf.mxu0
  %v553 = vadd.f32 %v524, %v552
  %v554 = vpop.f32.mrf.mxu0
  %v555 = vadd.f32 %v526, %v554
  %556 = vmatmul.bf16.gmra.mxu0 %v187
  %v557 = vpop.f32.mrf.mxu0
  %v558 = vadd.f32 %v529, %v557
  %v559 = vpop.f32.mrf.mxu0
  %v560 = vadd.f32 %v531, %v559
  %561 = vmatmul.bf16.gmra.mxu0 %v192
  %v562 = vpop.f32.mrf.mxu0
  %v563 = vadd.f32 %v534, %v562
  %v564 = vpop.f32.mrf.mxu0
  %v565 = vadd.f32 %v536, %v564
  %566 = vmatmul.bf16.gmra.mxu0 %v197
  %v567 = vpop.f32.mrf.mxu0
  %v568 = vadd.f32 %v539, %v567
  %v569 = vpop.f32.mrf.mxu0
  %v570 = vadd.f32 %v541, %v569
  %571 = vdwg.mxu0
  %572 = vmatpush.bf16.msra.mxu0 0
  %573 = vmatpush.bf16.msra.mxu0 0
  %574 = vmatpush.bf16.msra.mxu0 %v404
  %575 = vmatpush.bf16.msra.mxu0 %v403
  %576 = vmatpush.bf16.msra.mxu0 %v402
  %577 = vmatpush.bf16.msra.mxu0 %v401
  %578 = vmatpush.bf16.msra.mxu0 %v400
  %579 = vmatpush.bf16.msra.mxu0 %v399
  %580 = vmatmul.bf16.gmra.mxu0 %v445
  %v581 = vpop.f32.mrf.mxu0
  %v582 = vadd.f32 %v553, %v581
  %v583 = vpop.f32.mrf.mxu0
  %v584 = vadd.f32 %v555, %v583
  %585 = vmatmul.bf16.gmra.mxu0 %v448
  %v586 = vpop.f32.mrf.mxu0
  %v587 = vadd.f32 %v558, %v586
  %v588 = vpop.f32.mrf.mxu0
  %v589 = vadd.f32 %v560, %v588
  %590 = vmatmul.bf16.gmra.mxu0 %v451
  %v591 = vpop.f32.mrf.mxu0
  %v592 = vadd.f32 %v563, %v591
  %v593 = vpop.f32.mrf.mxu0
  %v594 = vadd.f32 %v565, %v593
  %595 = vmatmul.bf16.gmra.mxu0 %v454
  %v596 = vpop.f32.mrf.mxu0
  %v597 = vadd.f32 %v568, %v596
  %v598 = vpop.f32.mrf.mxu0
  %v599 = vadd.f32 %v570, %v598
  %600 = vdwg.mxu0
  %v601 = vmax.f32 %v582, %v587
  %v602 = vmax.f32 %v584, %v589
  %v603 = vmax.f32 %v592, %v597
  %v604 = vmax.f32 %v594, %v599
  %v605 = vmax.f32 %v601, %v603
  %v606 = vmax.f32 %v602, %v604
  %v607 = vld [vmem:[%s1] sm:$0xff]
  %v608 = vld [vmem:[%s1 + $0x8] sm:$0xff]
  %610 = vset.pattern.permute.xlu0 0
  %611 = vperm.xlu0 %610, %v607
  %v612 = vpop.permute.xlu0 %611
  %615 = vset.pattern.permute.xlu0 0
  %616 = vperm.xlu0 %615, %v608
  %v617 = vpop.permute.xlu0 %616
  %v619 = vadd.f32 %v605, %v612
  %v620 = vadd.f32 %v606, %v617
  %v621 = vmax.f32 %v619, 0.0
  %v622 = vmax.f32 %v620, 0.0
  %v623 = vpack.c.bf16 %v621, %v621
  %v624 = vpack.c.bf16 %v622, %v622
  %625 = vst [vmem:[%s3] sm:$0xf] %v623
  %626 = vst [vmem:[%s3 + $0x4] sm:$0xf] %v624
  // Predicated region
  $region14: #{lenet_forward.4} parent=0 // pred_check
    _
  $region15: #{lenet_forward.4} parent=0 // pred_check_branch
    %628 = sbr.rel (0) target = $region17
  $region16: #{lenet_forward.4} parent=0 // pred_region
    _
  $region17: #{lenet_forward.4} parent=0 // pred_fallthru
    _
  // Predicated region
  $region18: #{lenet_forward.4} parent=0 // pred_check
    _
  $region19: #{lenet_forward.4} parent=0 // pred_check_branch
    %630 = sbr.rel (0) target = $region21
  $region20: #{lenet_forward.4} parent=0 // pred_region
    _
  $region21: #{lenet_forward.4} parent=0 // pred_fallthru
    _

// kernel: lenet_forward.5
$region0: #{lenet_forward.5}
  #allocation0 [shape = 'u32[]', space=smem, size = 0x4, offset = 0x4, fixed_abs, tag = 'smem constant byte address 0x4 - core index']
  #allocation1 [shape = 'u32[72,128]{1,0:T(1,128)}', space=vmem, size = 0x9000, scoped, tag = 'internal scratch']
  %s0 = inlined_call_operand.vmem [shape: bf16[120,400], index: 0, kind: input, shape index: {}]
  %s1 = inlined_call_operand.vmem [shape: f32[120,1], index: 1, kind: input, shape index: {}]
  %s2 = inlined_call_operand.vmem [shape: bf16[88,120], index: 2, kind: input, shape index: {}]
  %s3 = inlined_call_operand.vmem [shape: f32[88,1], index: 3, kind: input, shape index: {}]
  %s4 = inlined_call_operand.vmem [shape: bf16[16,88], index: 4, kind: input, shape index: {}]
  %s5 = inlined_call_operand.vmem [shape: f32[16,1], index: 5, kind: input, shape index: {}]
  %s6 = inlined_call_operand.vmem [shape: bf16[400,128], index: 6, kind: input, shape index: {}]
  %s7 = inlined_call_operand.vmem [shape: f32[16,128], index: 7, kind: output, shape index: {}]
  %s8 = sld [smem:[#allocation0]]
  $region38: #{lenet_forward.5} parent=0
    _
  %s10 = ssub.s32 1, %s8
  %s11 = scalar_select 0, %s10, %s8
  // Predicated region
  $region2: #{lenet_forward.5} parent=0 // pred_check
    _
  $region3: #{lenet_forward.5} parent=0 // pred_check_branch
    %13 = sbr.rel (0) target = $region5
  $region4: #{lenet_forward.5} parent=0 // pred_region
    _
  $region5: #{lenet_forward.5} parent=0 // pred_fallthru
    _
  // Predicated region
  $region6: #{lenet_forward.5} parent=0 // pred_check
    _
  $region7: #{lenet_forward.5} parent=0 // pred_check_branch
    %15 = sbr.rel (0) target = $region9
  $region8: #{lenet_forward.5} parent=0 // pred_region
    _
  $region9: #{lenet_forward.5} parent=0 // pred_fallthru
    _
  // Predicated region
  $region10: #{lenet_forward.5} parent=0 // pred_check
    _
  $region11: #{lenet_forward.5} parent=0 // pred_check_branch
    %17 = sbr.rel (0) target = $region13
  $region12: #{lenet_forward.5} parent=0 // pred_region
    _
  $region13: #{lenet_forward.5} parent=0 // pred_fallthru
    _
  // Predicated region
  $region14: #{lenet_forward.5} parent=0 // pred_check
    _
  $region15: #{lenet_forward.5} parent=0 // pred_check_branch
    %19 = sbr.rel (0) target = $region17
  $region16: #{lenet_forward.5} parent=0 // pred_region
    _
  $region17: #{lenet_forward.5} parent=0 // pred_fallthru
    _
  // Predicated region
  $region18: #{lenet_forward.5} parent=0 // pred_check
    _
  $region19: #{lenet_forward.5} parent=0 // pred_check_branch
    %21 = sbr.rel (0) target = $region21
  $region20: #{lenet_forward.5} parent=0 // pred_region
    _
  $region21: #{lenet_forward.5} parent=0 // pred_fallthru
    _
  // Predicated region
  $region22: #{lenet_forward.5} parent=0 // pred_check
    _
  $region23: #{lenet_forward.5} parent=0 // pred_check_branch
    %23 = sbr.rel (0) target = $region25
  $region24: #{lenet_forward.5} parent=0 // pred_region
    _
  $region25: #{lenet_forward.5} parent=0 // pred_fallthru
    _
  // Predicated region
  $region26: #{lenet_forward.5} parent=0 // pred_check
    _
  $region27: #{lenet_forward.5} parent=0 // pred_check_branch
    %25 = sbr.rel (0) target = $region29
  $region28: #{lenet_forward.5} parent=0 // pred_region
    _
  $region29: #{lenet_forward.5} parent=0 // pred_fallthru
    _
  %v27 = vld [vmem:[%s0] sm:$0xff]
  %v28 = vld [vmem:[%s0 + $0x8] sm:$0xff]
  %v29 = vld [vmem:[%s0 + $0x10] sm:$0xff]
  %v30 = vld [vmem:[%s0 + $0x18] sm:$0xff]
  %v31 = vld [vmem:[%s0 + $0x20] sm:$0xff]
  %v32 = vld [vmem:[%s0 + $0x28] sm:$0xff]
  %v33 = vld [vmem:[%s0 + $0x30] sm:$0xff]
  %v34 = vld [vmem:[%s0 + $0x38] sm:$0xff]
  %v35 = vld [vmem:[%s0 + $0x40] sm:$0xff]
  %v36 = vld [vmem:[%s0 + $0x48] sm:$0xff]
  %v37 = vld [vmem:[%s0 + $0x50] sm:$0xff]
  %v38 = vld [vmem:[%s0 + $0x58] sm:$0xff]
  %v39 = vld [vmem:[%s0 + $0x60] sm:$0xff]
  %v40 = vld [vmem:[%s0 + $0x68] sm:$0xff]
  %v41 = vld [vmem:[%s0 + $0x70] sm:$0xff]
  %v42 = vld [vmem:[%s0 + $0x78] sm:$0xff]
  %v43 = vld [vmem:[%s0 + $0x80] sm:$0xff]
  %v44 = vld [vmem:[%s0 + $0x88] sm:$0xff]
  %v45 = vld [vmem:[%s0 + $0x90] sm:$0xff]
  %v46 = vld [vmem:[%s0 + $0x98] sm:$0xff]
  %v47 = vld [vmem:[%s0 + $0xa0] sm:$0xff]
  %v48 = vld [vmem:[%s0 + $0xa8] sm:$0xff]
  %v49 = vld [vmem:[%s0 + $0xb0] sm:$0xff]
  %v50 = vld [vmem:[%s0 + $0xb8] sm:$0xff]
  %v51 = vld [vmem:[%s0 + $0xc0] sm:$0xff]
  %v52 = vld [vmem:[%s0 + $0xc8] sm:$0xff]
  %v53 = vld [vmem:[%s0 + $0xd0] sm:$0xff]
  %v54 = vld [vmem:[%s0 + $0xd8] sm:$0xff]
  %v55 = vld [vmem:[%s0 + $0xe0] sm:$0xff]
  %v56 = vld [vmem:[%s0 + $0xe8] sm:$0xff]
  %v57 = vld [vmem:[%s6] sm:$0xf]
  %v58 = vld [vmem:[%s6 + $0x4] sm:$0xf]
  %v59 = vld [vmem:[%s6 + $0x8] sm:$0xf]
  %v60 = vld [vmem:[%s6 + $0xc] sm:$0xf]
  %v61 = vld [vmem:[%s6 + $0x10] sm:$0xf]
  %v62 = vld [vmem:[%s6 + $0x14] sm:$0xf]
  %v63 = vld [vmem:[%s6 + $0x18] sm:$0xf]
  %v64 = vld [vmem:[%s6 + $0x1c] sm:$0xf]
  %v65 = vld [vmem:[%s6 + $0x20] sm:$0xf]
  %v66 = vld [vmem:[%s6 + $0x24] sm:$0xf]
  %v67 = vld [vmem:[%s6 + $0x28] sm:$0xf]
  %v68 = vld [vmem:[%s6 + $0x2c] sm:$0xf]
  %v69 = vld [vmem:[%s6 + $0x30] sm:$0xf]
  %v70 = vld [vmem:[%s6 + $0x34] sm:$0xf]
  %v71 = vld [vmem:[%s6 + $0x38] sm:$0xf]
  %v72 = vld [vmem:[%s6 + $0x3c] sm:$0xf]
  %v73 = vld [vmem:[%s6 + $0x40] sm:$0xf]
  %v74 = vld [vmem:[%s6 + $0x44] sm:$0xf]
  %v75 = vld [vmem:[%s6 + $0x48] sm:$0xf]
  %v76 = vld [vmem:[%s6 + $0x4c] sm:$0xf]
  %v77 = vld [vmem:[%s6 + $0x50] sm:$0xf]
  %v78 = vld [vmem:[%s6 + $0x54] sm:$0xf]
  %v79 = vld [vmem:[%s6 + $0x58] sm:$0xf]
  %v80 = vld [vmem:[%s6 + $0x5c] sm:$0xf]
  %v81 = vld [vmem:[%s6 + $0x60] sm:$0xf]
  %v82 = vld [vmem:[%s6 + $0x64] sm:$0xf]
  %v83 = vld [vmem:[%s6 + $0x68] sm:$0xf]
  %v84 = vld [vmem:[%s6 + $0x6c] sm:$0xf]
  %v85 = vld [vmem:[%s6 + $0x70] sm:$0xf]
  %v86 = vld [vmem:[%s6 + $0x74] sm:$0xf]
  %v87 = vld [vmem:[%s6 + $0x78] sm:$0xf]
  %v88 = vld [vmem:[%s6 + $0x7c] sm:$0xf]
  %v89 = vld [vmem:[%s6 + $0x80] sm:$0xf]
  %v90 = vld [vmem:[%s6 + $0x84] sm:$0xf]
  %v91 = vld [vmem:[%s6 + $0x88] sm:$0xf]
  %v92 = vld [vmem:[%s6 + $0x8c] sm:$0xf]
  %v93 = vld [vmem:[%s6 + $0x90] sm:$0xf]
  %v94 = vld [vmem:[%s6 + $0x94] sm:$0xf]
  %v95 = vld [vmem:[%s6 + $0x98] sm:$0xf]
  %v96 = vld [vmem:[%s6 + $0x9c] sm:$0xf]
  %v97 = vld [vmem:[%s6 + $0xa0] sm:$0xf]
  %v98 = vld [vmem:[%s6 + $0xa4] sm:$0xf]
  %v99 = vld [vmem:[%s6 + $0xa8] sm:$0xf]
  %v100 = vld [vmem:[%s6 + $0xac] sm:$0xf]
  %v101 = vld [vmem:[%s6 + $0xb0] sm:$0xf]
  %v102 = vld [vmem:[%s6 + $0xb4] sm:$0xf]
  %v103 = vld [vmem:[%s6 + $0xb8] sm:$0xf]
  %v104 = vld [vmem:[%s6 + $0xbc] sm:$0xf]
  %v105 = vld [vmem:[%s6 + $0xc0] sm:$0xf]
  %v106 = vld [vmem:[%s6 + $0xc4] sm:$0xf]
  %v107 = vld [vmem:[%s1] sm:$0xff]
  %v108 = vld [vmem:[%s1 + $0x8] sm:$0xff]
  %v109 = vld [vmem:[%s1 + $0x10] sm:$0xff]
  %v110 = vld [vmem:[%s1 + $0x18] sm:$0xff]
  %v111 = vld [vmem:[%s1 + $0x20] sm:$0xff]
  %v112 = vld [vmem:[%s1 + $0x28] sm:$0xff]
  %v113 = vld [vmem:[%s1 + $0x30] sm:$0xff]
  %v114 = vld [vmem:[%s1 + $0x38] sm:$0xff]
  %v115 = vld [vmem:[%s1 + $0x40] sm:$0xff]
  %v116 = vld [vmem:[%s1 + $0x48] sm:$0xff]
  %v117 = vld [vmem:[%s1 + $0x50] sm:$0xff]
  %v118 = vld [vmem:[%s1 + $0x58] sm:$0xff]
  %v119 = vld [vmem:[%s1 + $0x60] sm:$0xff]
  %v120 = vld [vmem:[%s1 + $0x68] sm:$0xff]
  %v121 = vld [vmem:[%s1 + $0x70] sm:$0xff]
  %123 = vset.pattern.permute.xlu0 0
  %124 = vperm.xlu0 %123, %v107
  %v125 = vpop.permute.xlu0 %124
  %128 = vset.pattern.permute.xlu0 0
  %129 = vperm.xlu0 %128, %v108
  %v130 = vpop.permute.xlu0 %129
  %133 = vset.pattern.permute.xlu0 0
  %134 = vperm.xlu0 %133, %v109
  %v135 = vpop.permute.xlu0 %134
  %138 = vset.pattern.permute.xlu0 0
  %139 = vperm.xlu0 %138, %v110
  %v140 = vpop.permute.xlu0 %139
  %143 = vset.pattern.permute.xlu0 0
  %144 = vperm.xlu0 %143, %v111
  %v145 = vpop.permute.xlu0 %144
  %148 = vset.pattern.permute.xlu0 0
  %149 = vperm.xlu0 %148, %v112
  %v150 = vpop.permute.xlu0 %149
  %153 = vset.pattern.permute.xlu0 0
  %154 = vperm.xlu0 %153, %v113
  %v155 = vpop.permute.xlu0 %154
  %158 = vset.pattern.permute.xlu0 0
  %159 = vperm.xlu0 %158, %v114
  %v160 = vpop.permute.xlu0 %159
  %163 = vset.pattern.permute.xlu0 0
  %164 = vperm.xlu0 %163, %v115
  %v165 = vpop.permute.xlu0 %164
  %168 = vset.pattern.permute.xlu0 0
  %169 = vperm.xlu0 %168, %v116
  %v170 = vpop.permute.xlu0 %169
  %173 = vset.pattern.permute.xlu0 0
  %174 = vperm.xlu0 %173, %v117
  %v175 = vpop.permute.xlu0 %174
  %178 = vset.pattern.permute.xlu0 0
  %179 = vperm.xlu0 %178, %v118
  %v180 = vpop.permute.xlu0 %179
  %183 = vset.pattern.permute.xlu0 0
  %184 = vperm.xlu0 %183, %v119
  %v185 = vpop.permute.xlu0 %184
  %188 = vset.pattern.permute.xlu0 0
  %189 = vperm.xlu0 %188, %v120
  %v190 = vpop.permute.xlu0 %189
  %193 = vset.pattern.permute.xlu0 0
  %194 = vperm.xlu0 %193, %v121
  %v195 = vpop.permute.xlu0 %194
  %v227 = vunpack.c.l.b16 %v27
  %v228 = vunpack.c.h.b16 %v27
  %v229 = vunpack.c.l.b16 %v28
  %v230 = vunpack.c.h.b16 %v28
  %v231 = vunpack.c.l.b16 %v29
  %v232 = vunpack.c.h.b16 %v29
  %v233 = vunpack.c.l.b16 %v30
  %v234 = vunpack.c.h.b16 %v30
  %v235 = vunpack.c.l.b16 %v31
  %v236 = vunpack.c.h.b16 %v31
  %v237 = vunpack.c.l.b16 %v32
  %v238 = vunpack.c.h.b16 %v32
  %v239 = vunpack.c.l.b16 %v33
  %v240 = vunpack.c.h.b16 %v33
  %v241 = vunpack.c.l.b16 %v34
  %v242 = vunpack.c.h.b16 %v34
  %v243 = vunpack.c.l.b16 %v35
  %v244 = vunpack.c.h.b16 %v35
  %v245 = vunpack.c.l.b16 %v36
  %v246 = vunpack.c.h.b16 %v36
  %v247 = vunpack.c.l.b16 %v37
  %v248 = vunpack.c.h.b16 %v37
  %v249 = vunpack.c.l.b16 %v38
  %v250 = vunpack.c.h.b16 %v38
  %v251 = vunpack.c.l.b16 %v39
  %v252 = vunpack.c.h.b16 %v39
  %v253 = vunpack.c.l.b16 %v40
  %v254 = vunpack.c.h.b16 %v40
  %v255 = vunpack.c.l.b16 %v41
  %v256 = vunpack.c.h.b16 %v41
  %v257 = vunpack.c.l.b16 %v42
  %v258 = vunpack.c.h.b16 %v42
  %v259 = vunpack.c.l.b16 %v43
  %v260 = vunpack.c.h.b16 %v43
  %v261 = vunpack.c.l.b16 %v44
  %v262 = vunpack.c.h.b16 %v44
  %v263 = vunpack.c.l.b16 %v45
  %v264 = vunpack.c.h.b16 %v45
  %v265 = vunpack.c.l.b16 %v46
  %v266 = vunpack.c.h.b16 %v46
  %v267 = vunpack.c.l.b16 %v47
  %v268 = vunpack.c.h.b16 %v47
  %v269 = vunpack.c.l.b16 %v48
  %v270 = vunpack.c.h.b16 %v48
  %v271 = vunpack.c.l.b16 %v49
  %v272 = vunpack.c.h.b16 %v49
  %v273 = vunpack.c.l.b16 %v50
  %v274 = vunpack.c.h.b16 %v50
  %v275 = vunpack.c.l.b16 %v51
  %v276 = vunpack.c.h.b16 %v51
  %v277 = vunpack.c.l.b16 %v52
  %v278 = vunpack.c.h.b16 %v52
  %v279 = vunpack.c.l.b16 %v53
  %v280 = vunpack.c.h.b16 %v53
  %v281 = vunpack.c.l.b16 %v54
  %v282 = vunpack.c.h.b16 %v54
  %v283 = vunpack.c.l.b16 %v55
  %v284 = vunpack.c.h.b16 %v55
  %v285 = vunpack.c.l.b16 %v56
  %v286 = vunpack.c.h.b16 %v56
  %v287 = vpack.c.b16 %v231, %v227
  %v288 = vpack.c.b16 %v232, %v228
  %v289 = vpack.c.b16 %v233, %v229
  %v290 = vpack.c.b16 %v234, %v230
  %v291 = vpack.c.b16 %v239, %v235
  %v292 = vpack.c.b16 %v240, %v236
  %v293 = vpack.c.b16 %v241, %v237
  %v294 = vpack.c.b16 %v242, %v238
  %v295 = vpack.c.b16 %v247, %v243
  %v296 = vpack.c.b16 %v248, %v244
  %v297 = vpack.c.b16 %v249, %v245
  %v298 = vpack.c.b16 %v250, %v246
  %v299 = vpack.c.b16 %v255, %v251
  %v300 = vpack.c.b16 %v256, %v252
  %v301 = vpack.c.b16 %v257, %v253
  %v302 = vpack.c.b16 %v258, %v254
  %v303 = vpack.c.b16 %v263, %v259
  %v304 = vpack.c.b16 %v264, %v260
  %v305 = vpack.c.b16 %v265, %v261
  %v306 = vpack.c.b16 %v266, %v262
  %v307 = vpack.c.b16 %v271, %v267
  %v308 = vpack.c.b16 %v272, %v268
  %v309 = vpack.c.b16 %v273, %v269
  %v310 = vpack.c.b16 %v274, %v270
  %v311 = vpack.c.b16 %v279, %v275
  %v312 = vpack.c.b16 %v280, %v276
  %v313 = vpack.c.b16 %v281, %v277
  %v314 = vpack.c.b16 %v282, %v278
  %v315 = vpack.c.b16 %v283, %v283
  %v316 = vpack.c.b16 %v284, %v284
  %v317 = vpack.c.b16 %v285, %v285
  %v318 = vpack.c.b16 %v286, %v286
  %v393 = vunpack.c.l.b16 %v57
  %v394 = vunpack.c.l.b16 %v58
  %v395 = vunpack.c.l.b16 %v59
  %v396 = vunpack.c.l.b16 %v60
  %v397 = vunpack.c.l.b16 %v61
  %v398 = vunpack.c.l.b16 %v62
  %v399 = vunpack.c.l.b16 %v63
  %v400 = vunpack.c.l.b16 %v64
  %v401 = vunpack.c.l.b16 %v65
  %v402 = vunpack.c.l.b16 %v66
  %v403 = vunpack.c.l.b16 %v67
  %v404 = vunpack.c.l.b16 %v68
  %v405 = vunpack.c.l.b16 %v69
  %v406 = vunpack.c.l.b16 %v70
  %v407 = vunpack.c.l.b16 %v71
  %v408 = vunpack.c.l.b16 %v72
  %v409 = vunpack.c.l.b16 %v73
  %v410 = vunpack.c.l.b16 %v74
  %v411 = vunpack.c.l.b16 %v75
  %v412 = vunpack.c.l.b16 %v76
  %v413 = vunpack.c.l.b16 %v77
  %v414 = vunpack.c.l.b16 %v78
  %v415 = vunpack.c.l.b16 %v79
  %v416 = vunpack.c.l.b16 %v80
  %v417 = vunpack.c.l.b16 %v81
  %v418 = vunpack.c.l.b16 %v82
  %v419 = vunpack.c.l.b16 %v83
  %v420 = vunpack.c.l.b16 %v84
  %v421 = vunpack.c.l.b16 %v85
  %v422 = vunpack.c.l.b16 %v86
  %v423 = vunpack.c.l.b16 %v87
  %v424 = vunpack.c.l.b16 %v88
  %v425 = vunpack.c.l.b16 %v89
  %v426 = vunpack.c.l.b16 %v90
  %v427 = vunpack.c.l.b16 %v91
  %v428 = vunpack.c.l.b16 %v92
  %v429 = vunpack.c.l.b16 %v93
  %v430 = vunpack.c.l.b16 %v94
  %v431 = vunpack.c.l.b16 %v95
  %v432 = vunpack.c.l.b16 %v96
  %v433 = vunpack.c.l.b16 %v97
  %v434 = vunpack.c.l.b16 %v98
  %v435 = vunpack.c.l.b16 %v99
  %v436 = vunpack.c.l.b16 %v100
  %v437 = vunpack.c.l.b16 %v101
  %v438 = vunpack.c.l.b16 %v102
  %v439 = vunpack.c.l.b16 %v103
  %v440 = vunpack.c.l.b16 %v104
  %v441 = vunpack.c.l.b16 %v105
  %v442 = vunpack.c.l.b16 %v106
  %v443 = vpack.c.b16 %v394, %v393
  %v444 = vpack.c.b16 %v396, %v395
  %v445 = vpack.c.b16 %v398, %v397
  %v446 = vpack.c.b16 %v400, %v399
  %v447 = vpack.c.b16 %v402, %v401
  %v448 = vpack.c.b16 %v404, %v403
  %v449 = vpack.c.b16 %v406, %v405
  %v450 = vpack.c.b16 %v408, %v407
  %v451 = vpack.c.b16 %v410, %v409
  %v452 = vpack.c.b16 %v412, %v411
  %v453 = vpack.c.b16 %v414, %v413
  %v454 = vpack.c.b16 %v416, %v415
  %v455 = vpack.c.b16 %v418, %v417
  %v456 = vpack.c.b16 %v420, %v419
  %v457 = vpack.c.b16 %v422, %v421
  %v458 = vpack.c.b16 %v424, %v423
  %v459 = vpack.c.b16 %v426, %v425
  %v460 = vpack.c.b16 %v428, %v427
  %v461 = vpack.c.b16 %v430, %v429
  %v462 = vpack.c.b16 %v432, %v431
  %v463 = vpack.c.b16 %v434, %v433
  %v464 = vpack.c.b16 %v436, %v435
  %v465 = vpack.c.b16 %v438, %v437
  %v466 = vpack.c.b16 %v440, %v439
  %v467 = vpack.c.b16 %v442, %v441
  %vm493 = vcmask 130048
  %v495 = vsel %vm493, %v290, 0
  %v498 = vsel %vm493, %v294, 0
  %v501 = vsel %vm493, %v298, 0
  %v504 = vsel %vm493, %v302, 0
  %v507 = vsel %vm493, %v306, 0
  %v510 = vsel %vm493, %v310, 0
  %v513 = vsel %vm493, %v314, 0
  %v516 = vsel %vm493, %v318, 0
  %518 = vmatpush.bf16.msra.mxu0 %v450
  %519 = vmatpush.bf16.msra.mxu0 %v449
  %520 = vmatpush.bf16.msra.mxu0 %v448
  %521 = vmatpush.bf16.msra.mxu0 %v447
  %522 = vmatpush.bf16.msra.mxu0 %v446
  %523 = vmatpush.bf16.msra.mxu0 %v445
  %524 = vmatpush.bf16.msra.mxu0 %v444
  %525 = vmatpush.bf16.msra.mxu0 %v443
  %526 = vmatmul.bf16.gmra.mxu0 %v287
  %v527 = vpop.f32.mrf.mxu0
  %v528 = vadd.f32 %v125, %v527
  %v529 = vpop.f32.mrf.mxu0
  %v530 = vadd.f32 %v130, %v529
  %531 = vmatmul.bf16.gmra.mxu0 %v291
  %v532 = vpop.f32.mrf.mxu0
  %v533 = vadd.f32 %v135, %v532
  %v534 = vpop.f32.mrf.mxu0
  %v535 = vadd.f32 %v140, %v534
  %536 = vmatmul.bf16.gmra.mxu0 %v295
  %v537 = vpop.f32.mrf.mxu0
  %v538 = vadd.f32 %v145, %v537
  %v539 = vpop.f32.mrf.mxu0
  %v540 = vadd.f32 %v150, %v539
  %541 = vmatmul.bf16.gmra.mxu0 %v299
  %v542 = vpop.f32.mrf.mxu0
  %v543 = vadd.f32 %v155, %v542
  %v544 = vpop.f32.mrf.mxu0
  %v545 = vadd.f32 %v160, %v544
  %546 = vmatmul.bf16.gmra.mxu0 %v303
  %v547 = vpop.f32.mrf.mxu0
  %v548 = vadd.f32 %v165, %v547
  %v549 = vpop.f32.mrf.mxu0
  %v550 = vadd.f32 %v170, %v549
  %551 = vmatmul.bf16.gmra.mxu0 %v307
  %v552 = vpop.f32.mrf.mxu0
  %v553 = vadd.f32 %v175, %v552
  %v554 = vpop.f32.mrf.mxu0
  %v555 = vadd.f32 %v180, %v554
  %556 = vmatmul.bf16.gmra.mxu0 %v311
  %v557 = vpop.f32.mrf.mxu0
  %v558 = vadd.f32 %v185, %v557
  %v559 = vpop.f32.mrf.mxu0
  %v560 = vadd.f32 %v190, %v559
  %561 = vmatmul.bf16.gmra.mxu0 %v315
  %v562 = vpop.f32.mrf.mxu0
  %v563 = vadd.f32 %v195, %v562
  %v564 = vpop.f32.mrf.mxu0
  %565 = vdwg.mxu0
  %566 = vmatpush.bf16.msra.mxu0 %v458
  %567 = vmatpush.bf16.msra.mxu0 %v457
  %568 = vmatpush.bf16.msra.mxu0 %v456
  %569 = vmatpush.bf16.msra.mxu0 %v455
  %570 = vmatpush.bf16.msra.mxu0 %v454
  %571 = vmatpush.bf16.msra.mxu0 %v453
  %572 = vmatpush.bf16.msra.mxu0 %v452
  %573 = vmatpush.bf16.msra.mxu0 %v451
  %574 = vmatmul.bf16.gmra.mxu0 %v288
  %v575 = vpop.f32.mrf.mxu0
  %v576 = vadd.f32 %v528, %v575
  %v577 = vpop.f32.mrf.mxu0
  %v578 = vadd.f32 %v530, %v577
  %579 = vmatmul.bf16.gmra.mxu0 %v292
  %v580 = vpop.f32.mrf.mxu0
  %v581 = vadd.f32 %v533, %v580
  %v582 = vpop.f32.mrf.mxu0
  %v583 = vadd.f32 %v535, %v582
  %584 = vmatmul.bf16.gmra.mxu0 %v296
  %v585 = vpop.f32.mrf.mxu0
  %v586 = vadd.f32 %v538, %v585
  %v587 = vpop.f32.mrf.mxu0
  %v588 = vadd.f32 %v540, %v587
  %589 = vmatmul.bf16.gmra.mxu0 %v300
  %v590 = vpop.f32.mrf.mxu0
  %v591 = vadd.f32 %v543, %v590
  %v592 = vpop.f32.mrf.mxu0
  %v593 = vadd.f32 %v545, %v592
  %594 = vmatmul.bf16.gmra.mxu0 %v304
  %v595 = vpop.f32.mrf.mxu0
  %v596 = vadd.f32 %v548, %v595
  %v597 = vpop.f32.mrf.mxu0
  %v598 = vadd.f32 %v550, %v597
  %599 = vmatmul.bf16.gmra.mxu0 %v308
  %v600 = vpop.f32.mrf.mxu0
  %v601 = vadd.f32 %v553, %v600
  %v602 = vpop.f32.mrf.mxu0
  %v603 = vadd.f32 %v555, %v602
  %604 = vmatmul.bf16.gmra.mxu0 %v312
  %v605 = vpop.f32.mrf.mxu0
  %v606 = vadd.f32 %v558, %v605
  %v607 = vpop.f32.mrf.mxu0
  %v608 = vadd.f32 %v560, %v607
  %609 = vmatmul.bf16.gmra.mxu0 %v316
  %v610 = vpop.f32.mrf.mxu0
  %v611 = vadd.f32 %v563, %v610
  %v612 = vpop.f32.mrf.mxu0
  %613 = vdwg.mxu0
  %614 = vmatpush.bf16.msra.mxu0 %v466
  %615 = vmatpush.bf16.msra.mxu0 %v465
  %616 = vmatpush.bf16.msra.mxu0 %v464
  %617 = vmatpush.bf16.msra.mxu0 %v463
  %618 = vmatpush.bf16.msra.mxu0 %v462
  %619 = vmatpush.bf16.msra.mxu0 %v461
  %620 = vmatpush.bf16.msra.mxu0 %v460
  %621 = vmatpush.bf16.msra.mxu0 %v459
  %622 = vmatmul.bf16.gmra.mxu0 %v289
  %v623 = vpop.f32.mrf.mxu0
  %v624 = vadd.f32 %v576, %v623
  %v625 = vpop.f32.mrf.mxu0
  %v626 = vadd.f32 %v578, %v625
  %627 = vmatmul.bf16.gmra.mxu0 %v293
  %v628 = vpop.f32.mrf.mxu0
  %v629 = vadd.f32 %v581, %v628
  %v630 = vpop.f32.mrf.mxu0
  %v631 = vadd.f32 %v583, %v630
  %632 = vmatmul.bf16.gmra.mxu0 %v297
  %v633 = vpop.f32.mrf.mxu0
  %v634 = vadd.f32 %v586, %v633
  %v635 = vpop.f32.mrf.mxu0
  %v636 = vadd.f32 %v588, %v635
  %637 = vmatmul.bf16.gmra.mxu0 %v301
  %v638 = vpop.f32.mrf.mxu0
  %v639 = vadd.f32 %v591, %v638
  %v640 = vpop.f32.mrf.mxu0
  %v641 = vadd.f32 %v593, %v640
  %642 = vmatmul.bf16.gmra.mxu0 %v305
  %v643 = vpop.f32.mrf.mxu0
  %v644 = vadd.f32 %v596, %v643
  %v645 = vpop.f32.mrf.mxu0
  %v646 = vadd.f32 %v598, %v645
  %647 = vmatmul.bf16.gmra.mxu0 %v309
  %v648 = vpop.f32.mrf.mxu0
  %v649 = vadd.f32 %v601, %v648
  %v650 = vpop.f32.mrf.mxu0
  %v651 = vadd.f32 %v603, %v650
  %652 = vmatmul.bf16.gmra.mxu0 %v313
  %v653 = vpop.f32.mrf.mxu0
  %v654 = vadd.f32 %v606, %v653
  %v655 = vpop.f32.mrf.mxu0
  %v656 = vadd.f32 %v608, %v655
  %657 = vmatmul.bf16.gmra.mxu0 %v317
  %v658 = vpop.f32.mrf.mxu0
  %v659 = vadd.f32 %v611, %v658
  %v660 = vpop.f32.mrf.mxu0
  %661 = vdwg.mxu0
  %662 = vmatpush.bf16.msra.mxu0 0
  %663 = vmatpush.bf16.msra.mxu0 0
  %664 = vmatpush.bf16.msra.mxu0 0
  %665 = vmatpush.bf16.msra.mxu0 0
  %666 = vmatpush.bf16.msra.mxu0 0
  %667 = vmatpush.bf16.msra.mxu0 0
  %668 = vmatpush.bf16.msra.mxu0 0
  %669 = vmatpush.bf16.msra.mxu0 %v467
  %670 = vmatmul.bf16.gmra.mxu0 %v495
  %v671 = vpop.f32.mrf.mxu0
  %v672 = vadd.f32 %v624, %v671
  %v673 = vpop.f32.mrf.mxu0
  %v674 = vadd.f32 %v626, %v673
  %675 = vmatmul.bf16.gmra.mxu0 %v498
  %v676 = vpop.f32.mrf.mxu0
  %v677 = vadd.f32 %v629, %v676
  %v678 = vpop.f32.mrf.mxu0
  %v679 = vadd.f32 %v631, %v678
  %680 = vmatmul.bf16.gmra.mxu0 %v501
  %v681 = vpop.f32.mrf.mxu0
  %v682 = vadd.f32 %v634, %v681
  %v683 = vpop.f32.mrf.mxu0
  %v684 = vadd.f32 %v636, %v683
  %685 = vmatmul.bf16.gmra.mxu0 %v504
  %v686 = vpop.f32.mrf.mxu0
  %v687 = vadd.f32 %v639, %v686
  %v688 = vpop.f32.mrf.mxu0
  %v689 = vadd.f32 %v641, %v688
  %690 = vmatmul.bf16.gmra.mxu0 %v507
  %v691 = vpop.f32.mrf.mxu0
  %v692 = vadd.f32 %v644, %v691
  %v693 = vpop.f32.mrf.mxu0
  %v694 = vadd.f32 %v646, %v693
  %695 = vmatmul.bf16.gmra.mxu0 %v510
  %v696 = vpop.f32.mrf.mxu0
  %v697 = vadd.f32 %v649, %v696
  %v698 = vpop.f32.mrf.mxu0
  %v699 = vadd.f32 %v651, %v698
  %700 = vmatmul.bf16.gmra.mxu0 %v513
  %v701 = vpop.f32.mrf.mxu0
  %v702 = vadd.f32 %v654, %v701
  %v703 = vpop.f32.mrf.mxu0
  %v704 = vadd.f32 %v656, %v703
  %705 = vmatmul.bf16.gmra.mxu0 %v516
  %v706 = vpop.f32.mrf.mxu0
  %v707 = vadd.f32 %v659, %v706
  %v708 = vpop.f32.mrf.mxu0
  %709 = vdwg.mxu0
  %v710 = vmax.f32 %v672, 0.0
  %v711 = vmax.f32 %v674, 0.0
  %v712 = vmax.f32 %v677, 0.0
  %v713 = vmax.f32 %v679, 0.0
  %v714 = vmax.f32 %v682, 0.0
  %v715 = vmax.f32 %v684, 0.0
  %v716 = vmax.f32 %v687, 0.0
  %v717 = vmax.f32 %v689, 0.0
  %v718 = vmax.f32 %v692, 0.0
  %v719 = vmax.f32 %v694, 0.0
  %v720 = vmax.f32 %v697, 0.0
  %v721 = vmax.f32 %v699, 0.0
  %v722 = vmax.f32 %v702, 0.0
  %v723 = vmax.f32 %v704, 0.0
  %v724 = vmax.f32 %v707, 0.0
  %v725 = vld [vmem:[%s2] sm:$0xf]
  %v726 = vld [vmem:[%s2 + $0x4] sm:$0xf]
  %v727 = vld [vmem:[%s2 + $0x8] sm:$0xf]
  %v728 = vld [vmem:[%s2 + $0xc] sm:$0xf]
  %v729 = vld [vmem:[%s2 + $0x10] sm:$0xf]
  %v730 = vld [vmem:[%s2 + $0x14] sm:$0xf]
  %v731 = vld [vmem:[%s2 + $0x18] sm:$0xf]
  %v732 = vld [vmem:[%s2 + $0x1c] sm:$0xf]
  %v733 = vld [vmem:[%s2 + $0x20] sm:$0xf]
  %v734 = vld [vmem:[%s2 + $0x24] sm:$0xf]
  %v735 = vld [vmem:[%s2 + $0x28] sm:$0xf]
  %v736 = vpack.c.bf16 %v711, %v710
  %v737 = vpack.c.bf16 %v713, %v712
  %v738 = vpack.c.bf16 %v715, %v714
  %v739 = vpack.c.bf16 %v717, %v716
  %v740 = vpack.c.bf16 %v719, %v718
  %v741 = vpack.c.bf16 %v721, %v720
  %v742 = vpack.c.bf16 %v723, %v722
  %v743 = vpack.c.bf16 %v724, %v724
  %v744 = vld [vmem:[%s3] sm:$0xff]
  %v745 = vld [vmem:[%s3 + $0x8] sm:$0xff]
  %v746 = vld [vmem:[%s3 + $0x10] sm:$0xff]
  %v747 = vld [vmem:[%s3 + $0x18] sm:$0xff]
  %v748 = vld [vmem:[%s3 + $0x20] sm:$0xff]
  %v749 = vld [vmem:[%s3 + $0x28] sm:$0xff]
  %v750 = vld [vmem:[%s3 + $0x30] sm:$0xff]
  %v751 = vld [vmem:[%s3 + $0x38] sm:$0xff]
  %v752 = vld [vmem:[%s3 + $0x40] sm:$0xff]
  %v753 = vld [vmem:[%s3 + $0x48] sm:$0xff]
  %v754 = vld [vmem:[%s3 + $0x50] sm:$0xff]
  %756 = vset.pattern.permute.xlu0 0
  %757 = vperm.xlu0 %756, %v744
  %v758 = vpop.permute.xlu0 %757
  %761 = vset.pattern.permute.xlu0 0
  %762 = vperm.xlu0 %761, %v745
  %v763 = vpop.permute.xlu0 %762
  %766 = vset.pattern.permute.xlu0 0
  %767 = vperm.xlu0 %766, %v746
  %v768 = vpop.permute.xlu0 %767
  %771 = vset.pattern.permute.xlu0 0
  %772 = vperm.xlu0 %771, %v747
  %v773 = vpop.permute.xlu0 %772
  %776 = vset.pattern.permute.xlu0 0
  %777 = vperm.xlu0 %776, %v748
  %v778 = vpop.permute.xlu0 %777
  %781 = vset.pattern.permute.xlu0 0
  %782 = vperm.xlu0 %781, %v749
  %v783 = vpop.permute.xlu0 %782
  %786 = vset.pattern.permute.xlu0 0
  %787 = vperm.xlu0 %786, %v750
  %v788 = vpop.permute.xlu0 %787
  %791 = vset.pattern.permute.xlu0 0
  %792 = vperm.xlu0 %791, %v751
  %v793 = vpop.permute.xlu0 %792
  %796 = vset.pattern.permute.xlu0 0
  %797 = vperm.xlu0 %796, %v752
  %v798 = vpop.permute.xlu0 %797
  %801 = vset.pattern.permute.xlu0 0
  %802 = vperm.xlu0 %801, %v753
  %v803 = vpop.permute.xlu0 %802
  %806 = vset.pattern.permute.xlu0 0
  %807 = vperm.xlu0 %806, %v754
  %v808 = vpop.permute.xlu0 %807
  %v821 = vunpack.c.l.b16 %v725
  %v822 = vunpack.c.l.b16 %v726
  %v823 = vunpack.c.l.b16 %v727
  %v824 = vunpack.c.l.b16 %v728
  %v825 = vunpack.c.l.b16 %v729
  %v826 = vunpack.c.l.b16 %v730
  %v827 = vunpack.c.l.b16 %v731
  %v828 = vunpack.c.l.b16 %v732
  %v829 = vunpack.c.l.b16 %v733
  %v830 = vunpack.c.l.b16 %v734
  %v831 = vunpack.c.l.b16 %v735
  %v832 = vpack.c.b16 %v822, %v821
  %v833 = vpack.c.b16 %v824, %v823
  %v834 = vpack.c.b16 %v826, %v825
  %v835 = vpack.c.b16 %v828, %v827
  %v836 = vpack.c.b16 %v830, %v829
  %v837 = vpack.c.b16 %v831, %v831
  %vm838 = vcmask 982016
  %v840 = vsel %vm838, %v832, 0
  %v843 = vsel %vm838, %v833, 0
  %v846 = vsel %vm838, %v834, 0
  %v849 = vsel %vm838, %v835, 0
  %v852 = vsel %vm838, %v836, 0
  %v855 = vsel %vm838, %v837, 0
  %vm857 = vcmask 1043456
  %v859 = vsel %vm857, %v743, 0
  %861 = vmatpush.bf16.msra.mxu0 %v859
  %862 = vmatpush.bf16.msra.mxu0 %v742
  %863 = vmatpush.bf16.msra.mxu0 %v741
  %864 = vmatpush.bf16.msra.mxu0 %v740
  %865 = vmatpush.bf16.msra.mxu0 %v739
  %866 = vmatpush.bf16.msra.mxu0 %v738
  %867 = vmatpush.bf16.msra.mxu0 %v737
  %868 = vmatpush.bf16.msra.mxu0 %v736
  %869 = vmatmul.bf16.gmra.mxu0 %v840
  %v870 = vpop.f32.mrf.mxu0
  %v871 = vadd.f32 %v758, %v870
  %v872 = vpop.f32.mrf.mxu0
  %v873 = vadd.f32 %v763, %v872
  %874 = vmatmul.bf16.gmra.mxu0 %v843
  %v875 = vpop.f32.mrf.mxu0
  %v876 = vadd.f32 %v768, %v875
  %v877 = vpop.f32.mrf.mxu0
  %v878 = vadd.f32 %v773, %v877
  %879 = vmatmul.bf16.gmra.mxu0 %v846
  %v880 = vpop.f32.mrf.mxu0
  %v881 = vadd.f32 %v778, %v880
  %v882 = vpop.f32.mrf.mxu0
  %v883 = vadd.f32 %v783, %v882
  %884 = vmatmul.bf16.gmra.mxu0 %v849
  %v885 = vpop.f32.mrf.mxu0
  %v886 = vadd.f32 %v788, %v885
  %v887 = vpop.f32.mrf.mxu0
  %v888 = vadd.f32 %v793, %v887
  %889 = vmatmul.bf16.gmra.mxu0 %v852
  %v890 = vpop.f32.mrf.mxu0
  %v891 = vadd.f32 %v798, %v890
  %v892 = vpop.f32.mrf.mxu0
  %v893 = vadd.f32 %v803, %v892
  %894 = vmatmul.bf16.gmra.mxu0 %v855
  %v895 = vpop.f32.mrf.mxu0
  %v896 = vadd.f32 %v808, %v895
  %v897 = vpop.f32.mrf.mxu0
  %898 = vdwg.mxu0
  %v899 = vmax.f32 %v871, 0.0
  %v900 = vmax.f32 %v873, 0.0
  %v901 = vmax.f32 %v876, 0.0
  %v902 = vmax.f32 %v878, 0.0
  %v903 = vmax.f32 %v881, 0.0
  %v904 = vmax.f32 %v883, 0.0
  %v905 = vmax.f32 %v886, 0.0
  %v906 = vmax.f32 %v888, 0.0
  %v907 = vmax.f32 %v891, 0.0
  %v908 = vmax.f32 %v893, 0.0
  %v909 = vmax.f32 %v896, 0.0
  %v910 = vld [vmem:[%s4] sm:$0xf]
  %v911 = vld [vmem:[%s4 + $0x4] sm:$0xf]
  %v912 = vpack.c.bf16 %v900, %v899
  %v913 = vpack.c.bf16 %v902, %v901
  %v914 = vpack.c.bf16 %v904, %v903
  %v915 = vpack.c.bf16 %v906, %v905
  %v916 = vpack.c.bf16 %v908, %v907
  %v917 = vpack.c.bf16 %v909, %v909
  %v918 = vld [vmem:[%s5] sm:$0xff]
  %v919 = vld [vmem:[%s5 + $0x8] sm:$0xff]
  %921 = vset.pattern.permute.xlu0 0
  %922 = vperm.xlu0 %921, %v918
  %v923 = vpop.permute.xlu0 %922
  %926 = vset.pattern.permute.xlu0 0
  %927 = vperm.xlu0 %926, %v919
  %v928 = vpop.permute.xlu0 %927
  %v932 = vunpack.c.l.b16 %v910
  %v933 = vunpack.c.l.b16 %v911
  %v934 = vpack.c.b16 %v933, %v932
  %vm935 = vcmask 719872
  %v937 = vsel %vm935, %v934, 0
  %v940 = vsel %vm857, %v917, 0
  %942 = vmatpush.bf16.msra.mxu0 0
  %943 = vmatpush.bf16.msra.mxu0 0
  %944 = vmatpush.bf16.msra.mxu0 %v940
  %945 = vmatpush.bf16.msra.mxu0 %v916
  %946 = vmatpush.bf16.msra.mxu0 %v915
  %947 = vmatpush.bf16.msra.mxu0 %v914
  %948 = vmatpush.bf16.msra.mxu0 %v913
  %949 = vmatpush.bf16.msra.mxu0 %v912
  %950 = vmatmul.bf16.gmra.mxu0 %v937
  %v951 = vpop.f32.mrf.mxu0
  %v952 = vadd.f32 %v923, %v951
  %v953 = vpop.f32.mrf.mxu0
  %v954 = vadd.f32 %v928, %v953
  %955 = vdwg.mxu0
  %956 = vst [vmem:[%s7] sm:$0xff] %v952
  %957 = vst [vmem:[%s7 + $0x8] sm:$0xff] %v954
  // Predicated region
  $region30: #{lenet_forward.5} parent=0 // pred_check
    _
  $region31: #{lenet_forward.5} parent=0 // pred_check_branch
    %959 = sbr.rel (0) target = $region33
  $region32: #{lenet_forward.5} parent=0 // pred_region
    _
  $region33: #{lenet_forward.5} parent=0 // pred_fallthru
    _
  // Predicated region
  $region34: #{lenet_forward.5} parent=0 // pred_check
    _
  $region35: #{lenet_forward.5} parent=0 // pred_check_branch
    %961 = sbr.rel (0) target = $region37
  $region36: #{lenet_forward.5} parent=0 // pred_region
    _
  $region37: #{lenet_forward.5} parent=0 // pred_fallthru
    _

</llo_original>
